<compile_context>
chip_gen: v6e
topology: v6e:2x2x1
jax: 0.10.0
libtpu: 0.0.40
codegen_flags: <defaults>
</compile_context>

<pallas_src>
import functools
import math

import jax
import jax.numpy as jnp
from jax.experimental import pallas as pl
from jax.experimental.pallas import tpu as pltpu

STANDARDIZED_OB_CLAMPS = (-5.0, 5.0)
LN_EPS = 1e-5            # nn.LayerNorm default eps
NEG_BIG = -1e30          # pad-atom bias -> exactly zero probability after softmax

# Module hidden sizes (real) and their lane-padded widths used by the kernel.
H1_REAL, H2_REAL = 400, 300
H1_PAD, H2_PAD, HOUT_PAD = 512, 384, 128
INV_N1 = 1.0 / H1_REAL   # hardcoded LN normalizers (NOT 1/padded-width)
INV_N2 = 1.0 / H2_REAL


def _round_up(x, m):
    return ((x + m - 1) // m) * m


# ----------------------------- kernel ---------------------------------------

def critic_kernel(ob_ref, ac_ref, mean_ref, inv_std_ref,
                  w1o_ref, w1a_ref, b1_ref, g1_ref, be1_ref,
                  w2_ref, b2_ref, g2_ref, be2_ref,
                  w3_ref, b3_ref,
                  out_ref):
    # --- standardize + clamp observations only (ac is never clamped) ---
    ob = ob_ref[...].astype(jnp.float32)
    ob = jnp.clip((ob - mean_ref[...]) * inv_std_ref[...],
                  STANDARDIZED_OB_CLAMPS[0], STANDARDIZED_OB_CLAMPS[1])
    ac = ac_ref[...].astype(jnp.float32)

    # --- fc_block_1: Linear(ob)+Linear(ac) fused, LayerNorm(400), ReLU ------
    # Padded columns (400..511) of W1/b1 are zero, so h1 is exactly 0 there.
    h = (jnp.dot(ob.astype(jnp.bfloat16), w1o_ref[...],
                 preferred_element_type=jnp.float32)
         + jnp.dot(ac.astype(jnp.bfloat16), w1a_ref[...],
                   preferred_element_type=jnp.float32)
         + b1_ref[...])
    mask1 = jax.lax.broadcasted_iota(jnp.int32, (1, H1_PAD), 1) < H1_REAL
    mu1 = jnp.sum(h, axis=-1, keepdims=True) * INV_N1       # pads contribute 0
    d1 = jnp.where(mask1, h - mu1, 0.0)                     # centered, pads -> 0
    var1 = jnp.sum(d1 * d1, axis=-1, keepdims=True) * INV_N1
    h = jnp.maximum(
        d1 * jax.lax.rsqrt(var1 + LN_EPS) * g1_ref[...] + be1_ref[...], 0.0)

    # --- fc_block_2: Linear(400->300), LayerNorm(300), ReLU -----------------
    h2 = jnp.dot(h.astype(jnp.bfloat16), w2_ref[...],
                 preferred_element_type=jnp.float32) + b2_ref[...]
    mask2 = jax.lax.broadcasted_iota(jnp.int32, (1, H2_PAD), 1) < H2_REAL
    mu2 = jnp.sum(h2, axis=-1, keepdims=True) * INV_N2
    d2 = jnp.where(mask2, h2 - mu2, 0.0)
    var2 = jnp.sum(d2 * d2, axis=-1, keepdims=True) * INV_N2
    h2 = jnp.maximum(
        d2 * jax.lax.rsqrt(var2 + LN_EPS) * g2_ref[...] + be2_ref[...], 0.0)

    # --- head (lane-padded to 128 atoms; pad atoms have bias -1e30) ---------
    z = jnp.dot(h2.astype(jnp.bfloat16), w3_ref[...],
                preferred_element_type=jnp.float32) + b3_ref[...]

    # --- use_c51: exp(log_softmax(z, dim=1)) == softmax(z, dim=1) -----------
    m = jnp.max(z, axis=-1, keepdims=True)
    p = jnp.exp(z - m)                                       # pad atoms -> exactly 0
    s = jnp.sum(p, axis=-1, keepdims=True)
    r = pl.reciprocal(s, approx=True)                        # EUP vrcp
    r = r * (2.0 - s * r)                                    # one Newton step
    out_ref[...] = p * r


# ----------------------------- one-time param prep --------------------------

def prepare_params(params, ob_dim, ac_dim):
    """Hoisted, one-time preprocessing: split W1 by rows, lane-pad hidden dims,
    cast matmul weights to bf16, pre-invert rms_std.  The result is cached and
    reused across every critic_forward call."""
    c1 = H1_PAD - H1_REAL
    c2 = H2_PAD - H2_REAL
    num_heads = params["w3"].shape[1]
    c3 = HOUT_PAD - num_heads

    w1 = params["w1"]                                        # (ob_dim+ac_dim, 400)
    kp = {
        "mean": params["rms_mean"].astype(jnp.float32),
        "inv_std": (1.0 / params["rms_std"]).astype(jnp.float32),
        "w1o": jnp.pad(w1[:ob_dim], ((0, 0), (0, c1))).astype(jnp.bfloat16),
        "w1a": jnp.pad(w1[ob_dim:], ((0, 0), (0, c1))).astype(jnp.bfloat16),
        "b1": jnp.pad(params["b1"], ((0, 0), (0, c1))),
        "g1": jnp.pad(params["ln1_g"], ((0, 0), (0, c1))),
        "be1": jnp.pad(params["ln1_b"], ((0, 0), (0, c1))),
        "w2": jnp.pad(params["w2"], ((0, c1), (0, c2))).astype(jnp.bfloat16),
        "b2": jnp.pad(params["b2"], ((0, 0), (0, c2))),
        "g2": jnp.pad(params["ln2_g"], ((0, 0), (0, c2))),
        "be2": jnp.pad(params["ln2_b"], ((0, 0), (0, c2))),
        "w3": jnp.pad(params["w3"], ((0, c2), (0, c3))).astype(jnp.bfloat16),
        "b3": jnp.pad(params["b3"], ((0, 0), (0, c3)), constant_values=NEG_BIG),
    }
    return kp


# ----------------------------- wrapper (hot path) ---------------------------

def critic_forward(ob, ac, kp, *, num_heads=51, tile_b=1024, return_padded=False):
    b, ob_dim = ob.shape
    ac_dim = ac.shape[1]

    # Batch tile: multiple of 16 (bf16 sublane packing), and >= 2 grid steps
    # whenever the batch allows it so both v7x TensorCores get work.
    if b <= 16:
        tb = b
    else:
        tb = min(tile_b, _round_up(pl.cdiv(b, 2), 16))
    grid = (pl.cdiv(b, tb),)

    rows = lambda i: (i, 0)      # batch-tiled operands
    pinned = lambda i: (0, 0)    # weights/params: same block every step (VMEM-resident)

    in_specs = [
        pl.BlockSpec((tb, ob_dim), rows),
        pl.BlockSpec((tb, ac_dim), rows),
        pl.BlockSpec((1, ob_dim), pinned),
        pl.BlockSpec((1, ob_dim), pinned),
        pl.BlockSpec((ob_dim, H1_PAD), pinned),
        pl.BlockSpec((ac_dim, H1_PAD), pinned),
        pl.BlockSpec((1, H1_PAD), pinned),
        pl.BlockSpec((1, H1_PAD), pinned),
        pl.BlockSpec((1, H1_PAD), pinned),
        pl.BlockSpec((H1_PAD, H2_PAD), pinned),
        pl.BlockSpec((1, H2_PAD), pinned),
        pl.BlockSpec((1, H2_PAD), pinned),
        pl.BlockSpec((1, H2_PAD), pinned),
        pl.BlockSpec((H2_PAD, HOUT_PAD), pinned),
        pl.BlockSpec((1, HOUT_PAD), pinned),
    ]
    out_spec = pl.BlockSpec((tb, HOUT_PAD), rows)

    flops = 2 * b * (ob_dim * H1_PAD + ac_dim * H1_PAD
                     + H1_PAD * H2_PAD + H2_PAD * HOUT_PAD)
    bytes_accessed = (b * (ob_dim + ac_dim + HOUT_PAD) * 4
                      + ((ob_dim + ac_dim) * H1_PAD + H1_PAD * H2_PAD
                         + H2_PAD * HOUT_PAD) * 2)
    transcendentals = b * (HOUT_PAD + 3)

    out_padded = pl.pallas_call(
        critic_kernel,
        out_shape=jax.ShapeDtypeStruct((b, HOUT_PAD), jnp.float32),
        grid=grid,
        in_specs=in_specs,
        out_specs=out_spec,
        compiler_params=pltpu.CompilerParams(
            dimension_semantics=("parallel",)),   # megacore sharding on v7x
        cost_estimate=pl.CostEstimate(flops=flops,
                                      transcendentals=transcendentals,
                                      bytes_accessed=bytes_accessed),
    )(ob, ac, kp["mean"], kp["inv_std"],
      kp["w1o"], kp["w1a"], kp["b1"], kp["g1"], kp["be1"],
      kp["w2"], kp["b2"], kp["g2"], kp["be2"],
      kp["w3"], kp["b3"])

    if return_padded:
        return out_padded          # pad atoms are exactly 0; avoids the slice copy
    return out_padded[:, :num_heads]


# ---------------- pure-JAX reference (f32) ----------------------------------

def critic_reference(ob, ac, params):
    ob_s = jnp.clip((ob - params["rms_mean"]) / params["rms_std"],
                    STANDARDIZED_OB_CLAMPS[0], STANDARDIZED_OB_CLAMPS[1])
    x = jnp.concatenate([ob_s, ac], -1)

    def ln(h, g, be):
        mu = jnp.mean(h, -1, keepdims=True)
        var = jnp.mean((h - mu) ** 2, -1, keepdims=True)
        return (h - mu) * jax.lax.rsqrt(var + LN_EPS) * g + be

    h = x @ params["w1"] + params["b1"]
    h = jnp.maximum(ln(h, params["ln1_g"], params["ln1_b"]), 0.0)
    h2 = h @ params["w2"] + params["b2"]
    h2 = jnp.maximum(ln(h2, params["ln2_g"], params["ln2_b"]), 0.0)
    z = h2 @ params["w3"] + params["b3"]
    return jax.nn.softmax(z, axis=-1)


# ---------------- deterministic parameter construction (synthetic) ----------

def orthogonal(key, shape, gain):
    """Orthogonal init for a (out, in) weight, like nn.init.orthogonal_."""
    rows, cols = shape
    a = jax.random.normal(key, (max(rows, cols), min(rows, cols)), jnp.float32)
    q, r = jnp.linalg.qr(a)
    q = q * jnp.sign(jnp.diagonal(r))
    if rows < cols:
        q = q.T
    return (gain * q[:rows, :cols]).astype(jnp.float32)


def make_params(key, ob_dim, ac_dim, num_heads):
    ks = jax.random.split(key, 5)
    in_dim = ob_dim + ac_dim
    # PyTorch Linear weight is (out, in); we store its transpose (in, out).
    w1 = orthogonal(ks[0], (400, in_dim), math.sqrt(2)).T   # (in_dim, 400)
    w2 = orthogonal(ks[1], (300, 400), math.sqrt(2)).T      # (400, 300)
    w3 = orthogonal(ks[2], (num_heads, 300), 0.01).T        # (300, num_heads)
    rms_mean = 0.1 * jax.random.normal(ks[3], (1, ob_dim), jnp.float32)
    rms_std = 1.0 + jnp.abs(jax.random.normal(ks[4], (1, ob_dim), jnp.float32))
    return {
        "rms_mean": rms_mean,
        "rms_std": rms_std,
        "w1": w1,
        "b1": jnp.zeros((1, 400), jnp.float32),
        "ln1_g": jnp.ones((1, 400), jnp.float32),
        "ln1_b": jnp.zeros((1, 400), jnp.float32),
        "w2": w2,
        "b2": jnp.zeros((1, 300), jnp.float32),
        "ln2_g": jnp.ones((1, 300), jnp.float32),
        "ln2_b": jnp.zeros((1, 300), jnp.float32),
        "w3": w3,
        "b3": jnp.zeros((1, num_heads), jnp.float32),
    }


if __name__ == "__main__":
    key = jax.random.PRNGKey(0)
    k_ob, k_ac, k_par = jax.random.split(key, 3)

    batch, ob_dim, ac_dim, num_heads = 8, 11, 3, 51  # use_c51 -> 51 atoms

    ob = jax.random.normal(k_ob, (batch, ob_dim), jnp.float32)
    ac = jax.random.uniform(k_ac, (batch, ac_dim), jnp.float32,
                            minval=-1.0, maxval=1.0)
    params = make_params(k_par, ob_dim, ac_dim, num_heads)

    # One-time parameter prep (cached, outside the hot path).
    kp = jax.tree_util.tree_map(jax.block_until_ready,
                                prepare_params(params, ob_dim, ac_dim))

    # Hot path: a single jitted call around the pallas_call (+ output slice).
    fwd = jax.jit(functools.partial(critic_forward, num_heads=num_heads))
    out = jax.block_until_ready(fwd(ob, ac, kp))
    ref = jax.block_until_ready(critic_reference(ob, ac, params))

    assert out.shape == (batch, num_heads)
    assert bool(jnp.all(jnp.isfinite(out)))
    # c51 output is a softmax -> rows sum to 1 (Newton-refined reciprocal)
    assert bool(jnp.allclose(jnp.sum(out, axis=-1), 1.0, atol=1e-4))
    # bf16-weight kernel vs f32 reference
    assert bool(jnp.allclose(out, ref, atol=2e-3))
    print("KERNEL_OK")
</pallas_src>

<mosaic_0001>
module attributes {stable_mosaic.version = 11 : i64} {
  func.func @critic_kernel(%arg0: i32, %arg1: memref<8x11xf32, #tpu.memory_space<vmem>>, %arg2: memref<8x3xf32, #tpu.memory_space<vmem>>, %arg3: memref<1x11xf32, #tpu.memory_space<vmem>>, %arg4: memref<1x11xf32, #tpu.memory_space<vmem>>, %arg5: memref<11x512xbf16, #tpu.memory_space<vmem>>, %arg6: memref<3x512xbf16, #tpu.memory_space<vmem>>, %arg7: memref<1x512xf32, #tpu.memory_space<vmem>>, %arg8: memref<1x512xf32, #tpu.memory_space<vmem>>, %arg9: memref<1x512xf32, #tpu.memory_space<vmem>>, %arg10: memref<512x384xbf16, #tpu.memory_space<vmem>>, %arg11: memref<1x384xf32, #tpu.memory_space<vmem>>, %arg12: memref<1x384xf32, #tpu.memory_space<vmem>>, %arg13: memref<1x384xf32, #tpu.memory_space<vmem>>, %arg14: memref<384x128xbf16, #tpu.memory_space<vmem>>, %arg15: memref<1x128xf32, #tpu.memory_space<vmem>>, %arg16: memref<8x128xf32, #tpu.memory_space<vmem>>) attributes {dimension_semantics = [#tpu.dimension_semantics<parallel>], iteration_bounds = array<i64: 1>, scalar_prefetch = 0 : i64, scratch_operands = 0 : i64, tpu.core_type = #tpu.core_type<tc>, window_params = [{transform_indices = @transform_0, window_bounds = array<i64: 8, 11>}, {transform_indices = @transform_1, window_bounds = array<i64: 8, 3>}, {pipeline_mode = #tpu.pipeline_mode<synchronous>, transform_indices = @transform_2, window_bounds = array<i64: 1, 11>}, {pipeline_mode = #tpu.pipeline_mode<synchronous>, transform_indices = @transform_3, window_bounds = array<i64: 1, 11>}, {pipeline_mode = #tpu.pipeline_mode<synchronous>, transform_indices = @transform_4, window_bounds = array<i64: 11, 512>}, {pipeline_mode = #tpu.pipeline_mode<synchronous>, transform_indices = @transform_5, window_bounds = array<i64: 3, 512>}, {pipeline_mode = #tpu.pipeline_mode<synchronous>, transform_indices = @transform_6, window_bounds = array<i64: 1, 512>}, {pipeline_mode = #tpu.pipeline_mode<synchronous>, transform_indices = @transform_7, window_bounds = array<i64: 1, 512>}, {pipeline_mode = #tpu.pipeline_mode<synchronous>, transform_indices = @transform_8, window_bounds = array<i64: 1, 512>}, {pipeline_mode = #tpu.pipeline_mode<synchronous>, transform_indices = @transform_9, window_bounds = array<i64: 512, 384>}, {pipeline_mode = #tpu.pipeline_mode<synchronous>, transform_indices = @transform_10, window_bounds = array<i64: 1, 384>}, {pipeline_mode = #tpu.pipeline_mode<synchronous>, transform_indices = @transform_11, window_bounds = array<i64: 1, 384>}, {pipeline_mode = #tpu.pipeline_mode<synchronous>, transform_indices = @transform_12, window_bounds = array<i64: 1, 384>}, {pipeline_mode = #tpu.pipeline_mode<synchronous>, transform_indices = @transform_13, window_bounds = array<i64: 384, 128>}, {pipeline_mode = #tpu.pipeline_mode<synchronous>, transform_indices = @transform_14, window_bounds = array<i64: 1, 128>}, {transform_indices = @transform_15, window_bounds = array<i64: 8, 128>}]} {
    %c0 = arith.constant 0 : index
    %c0_0 = arith.constant 0 : index
    %0 = vector.load %arg1[%c0, %c0_0] : memref<8x11xf32, #tpu.memory_space<vmem>>, vector<8x11xf32>
    %c0_1 = arith.constant 0 : index
    %c0_2 = arith.constant 0 : index
    %1 = vector.load %arg3[%c0_1, %c0_2] : memref<1x11xf32, #tpu.memory_space<vmem>>, vector<1x11xf32>
    %2 = vector.broadcast %1 : vector<1x11xf32> to vector<8x11xf32>
    %3 = arith.subf %0, %2 : vector<8x11xf32>
    %c0_3 = arith.constant 0 : index
    %c0_4 = arith.constant 0 : index
    %4 = vector.load %arg4[%c0_3, %c0_4] : memref<1x11xf32, #tpu.memory_space<vmem>>, vector<1x11xf32>
    %5 = vector.broadcast %4 : vector<1x11xf32> to vector<8x11xf32>
    %6 = arith.mulf %3, %5 : vector<8x11xf32>
    %cst = arith.constant -5.000000e+00 : f32
    %cst_5 = arith.constant 5.000000e+00 : f32
    %7 = vector.broadcast %cst : f32 to vector<8x11xf32>
    %8 = arith.maximumf %7, %6 : vector<8x11xf32>
    %9 = vector.broadcast %cst_5 : f32 to vector<8x11xf32>
    %10 = arith.minimumf %9, %8 : vector<8x11xf32>
    %c0_6 = arith.constant 0 : index
    %c0_7 = arith.constant 0 : index
    %11 = vector.load %arg2[%c0_6, %c0_7] : memref<8x3xf32, #tpu.memory_space<vmem>>, vector<8x3xf32>
    %12 = arith.truncf %10 : vector<8x11xf32> to vector<8x11xbf16>
    %c0_8 = arith.constant 0 : index
    %c0_9 = arith.constant 0 : index
    %13 = vector.load %arg5[%c0_8, %c0_9] : memref<11x512xbf16, #tpu.memory_space<vmem>>, vector<11x512xbf16>
    %cst_10 = arith.constant dense<0.000000e+00> : vector<8x512xf32>
    %14 = tpu.matmul %12, %13, %cst_10 {dimension_numbers = #tpu.dot_dimension_numbers<[1], [0], [0], [1], [0, 0, 1, 1], [], []>} : vector<8x11xbf16>, vector<11x512xbf16>, vector<8x512xf32> -> vector<8x512xf32>
    %15 = arith.truncf %11 : vector<8x3xf32> to vector<8x3xbf16>
    %c0_11 = arith.constant 0 : index
    %c0_12 = arith.constant 0 : index
    %16 = vector.load %arg6[%c0_11, %c0_12] : memref<3x512xbf16, #tpu.memory_space<vmem>>, vector<3x512xbf16>
    %cst_13 = arith.constant dense<0.000000e+00> : vector<8x512xf32>
    %17 = tpu.matmul %15, %16, %cst_13 {dimension_numbers = #tpu.dot_dimension_numbers<[1], [0], [0], [1], [0, 0, 1, 1], [], []>} : vector<8x3xbf16>, vector<3x512xbf16>, vector<8x512xf32> -> vector<8x512xf32>
    %18 = arith.addf %14, %17 : vector<8x512xf32>
    %c0_14 = arith.constant 0 : index
    %c0_15 = arith.constant 0 : index
    %19 = vector.load %arg7[%c0_14, %c0_15] : memref<1x512xf32, #tpu.memory_space<vmem>>, vector<1x512xf32>
    %20 = vector.broadcast %19 : vector<1x512xf32> to vector<8x512xf32>
    %21 = arith.addf %18, %20 : vector<8x512xf32>
    %22 = tpu.iota {dimensions = array<i32: 1>} : vector<1x512xi32>
    %c400_i32 = arith.constant 400 : i32
    %23 = vector.broadcast %c400_i32 : i32 to vector<1x512xi32>
    %24 = arith.cmpi slt, %22, %23 : vector<1x512xi32>
    %cst_16 = arith.constant dense<0.000000e+00> : vector<8xf32>
    %25 = vector.multi_reduction <add>, %21, %cst_16 [1] : vector<8x512xf32> to vector<8xf32>
    %26 = vector.shape_cast %25 : vector<8xf32> to vector<8x1xf32>
    %cst_17 = arith.constant 2.500000e-03 : f32
    %27 = vector.broadcast %cst_17 : f32 to vector<8x1xf32>
    %28 = arith.mulf %26, %27 : vector<8x1xf32>
    %29 = vector.broadcast %28 : vector<8x1xf32> to vector<8x512xf32>
    %30 = arith.subf %21, %29 : vector<8x512xf32>
    %cst_18 = arith.constant 0.000000e+00 : f32
    %31 = vector.shape_cast %24 : vector<1x512xi1> to vector<1x512xi1>
    %32 = vector.broadcast %31 : vector<1x512xi1> to vector<8x512xi1>
    %33 = vector.broadcast %cst_18 : f32 to vector<8x512xf32>
    %34 = arith.select %32, %30, %33 : vector<8x512xi1>, vector<8x512xf32>
    %35 = arith.mulf %34, %34 : vector<8x512xf32>
    %cst_19 = arith.constant dense<0.000000e+00> : vector<8xf32>
    %36 = vector.multi_reduction <add>, %35, %cst_19 [1] : vector<8x512xf32> to vector<8xf32>
    %37 = vector.shape_cast %36 : vector<8xf32> to vector<8x1xf32>
    %cst_20 = arith.constant 2.500000e-03 : f32
    %38 = vector.broadcast %cst_20 : f32 to vector<8x1xf32>
    %39 = arith.mulf %37, %38 : vector<8x1xf32>
    %cst_21 = arith.constant 9.99999974E-6 : f32
    %40 = vector.broadcast %cst_21 : f32 to vector<8x1xf32>
    %41 = arith.addf %39, %40 : vector<8x1xf32>
    %42 = math.rsqrt %41 : vector<8x1xf32>
    %43 = vector.broadcast %42 : vector<8x1xf32> to vector<8x512xf32>
    %44 = arith.mulf %34, %43 : vector<8x512xf32>
    %c0_22 = arith.constant 0 : index
    %c0_23 = arith.constant 0 : index
    %45 = vector.load %arg8[%c0_22, %c0_23] : memref<1x512xf32, #tpu.memory_space<vmem>>, vector<1x512xf32>
    %46 = vector.broadcast %45 : vector<1x512xf32> to vector<8x512xf32>
    %47 = arith.mulf %44, %46 : vector<8x512xf32>
    %c0_24 = arith.constant 0 : index
    %c0_25 = arith.constant 0 : index
    %48 = vector.load %arg9[%c0_24, %c0_25] : memref<1x512xf32, #tpu.memory_space<vmem>>, vector<1x512xf32>
    %49 = vector.broadcast %48 : vector<1x512xf32> to vector<8x512xf32>
    %50 = arith.addf %47, %49 : vector<8x512xf32>
    %cst_26 = arith.constant 0.000000e+00 : f32
    %51 = vector.broadcast %cst_26 : f32 to vector<8x512xf32>
    %52 = arith.maximumf %50, %51 : vector<8x512xf32>
    %53 = arith.truncf %52 : vector<8x512xf32> to vector<8x512xbf16>
    %c0_27 = arith.constant 0 : index
    %c0_28 = arith.constant 0 : index
    %54 = vector.load %arg10[%c0_27, %c0_28] : memref<512x384xbf16, #tpu.memory_space<vmem>>, vector<512x384xbf16>
    %cst_29 = arith.constant dense<0.000000e+00> : vector<8x384xf32>
    %55 = tpu.matmul %53, %54, %cst_29 {dimension_numbers = #tpu.dot_dimension_numbers<[1], [0], [0], [1], [0, 0, 1, 1], [], []>} : vector<8x512xbf16>, vector<512x384xbf16>, vector<8x384xf32> -> vector<8x384xf32>
    %c0_30 = arith.constant 0 : index
    %c0_31 = arith.constant 0 : index
    %56 = vector.load %arg11[%c0_30, %c0_31] : memref<1x384xf32, #tpu.memory_space<vmem>>, vector<1x384xf32>
    %57 = vector.broadcast %56 : vector<1x384xf32> to vector<8x384xf32>
    %58 = arith.addf %55, %57 : vector<8x384xf32>
    %59 = tpu.iota {dimensions = array<i32: 1>} : vector<1x384xi32>
    %c300_i32 = arith.constant 300 : i32
    %60 = vector.broadcast %c300_i32 : i32 to vector<1x384xi32>
    %61 = arith.cmpi slt, %59, %60 : vector<1x384xi32>
    %cst_32 = arith.constant dense<0.000000e+00> : vector<8xf32>
    %62 = vector.multi_reduction <add>, %58, %cst_32 [1] : vector<8x384xf32> to vector<8xf32>
    %63 = vector.shape_cast %62 : vector<8xf32> to vector<8x1xf32>
    %cst_33 = arith.constant 0.00333333341 : f32
    %64 = vector.broadcast %cst_33 : f32 to vector<8x1xf32>
    %65 = arith.mulf %63, %64 : vector<8x1xf32>
    %66 = vector.broadcast %65 : vector<8x1xf32> to vector<8x384xf32>
    %67 = arith.subf %58, %66 : vector<8x384xf32>
    %cst_34 = arith.constant 0.000000e+00 : f32
    %68 = vector.shape_cast %61 : vector<1x384xi1> to vector<1x384xi1>
    %69 = vector.broadcast %68 : vector<1x384xi1> to vector<8x384xi1>
    %70 = vector.broadcast %cst_34 : f32 to vector<8x384xf32>
    %71 = arith.select %69, %67, %70 : vector<8x384xi1>, vector<8x384xf32>
    %72 = arith.mulf %71, %71 : vector<8x384xf32>
    %cst_35 = arith.constant dense<0.000000e+00> : vector<8xf32>
    %73 = vector.multi_reduction <add>, %72, %cst_35 [1] : vector<8x384xf32> to vector<8xf32>
    %74 = vector.shape_cast %73 : vector<8xf32> to vector<8x1xf32>
    %cst_36 = arith.constant 0.00333333341 : f32
    %75 = vector.broadcast %cst_36 : f32 to vector<8x1xf32>
    %76 = arith.mulf %74, %75 : vector<8x1xf32>
    %cst_37 = arith.constant 9.99999974E-6 : f32
    %77 = vector.broadcast %cst_37 : f32 to vector<8x1xf32>
    %78 = arith.addf %76, %77 : vector<8x1xf32>
    %79 = math.rsqrt %78 : vector<8x1xf32>
    %80 = vector.broadcast %79 : vector<8x1xf32> to vector<8x384xf32>
    %81 = arith.mulf %71, %80 : vector<8x384xf32>
    %c0_38 = arith.constant 0 : index
    %c0_39 = arith.constant 0 : index
    %82 = vector.load %arg12[%c0_38, %c0_39] : memref<1x384xf32, #tpu.memory_space<vmem>>, vector<1x384xf32>
    %83 = vector.broadcast %82 : vector<1x384xf32> to vector<8x384xf32>
    %84 = arith.mulf %81, %83 : vector<8x384xf32>
    %c0_40 = arith.constant 0 : index
    %c0_41 = arith.constant 0 : index
    %85 = vector.load %arg13[%c0_40, %c0_41] : memref<1x384xf32, #tpu.memory_space<vmem>>, vector<1x384xf32>
    %86 = vector.broadcast %85 : vector<1x384xf32> to vector<8x384xf32>
    %87 = arith.addf %84, %86 : vector<8x384xf32>
    %cst_42 = arith.constant 0.000000e+00 : f32
    %88 = vector.broadcast %cst_42 : f32 to vector<8x384xf32>
    %89 = arith.maximumf %87, %88 : vector<8x384xf32>
    %90 = arith.truncf %89 : vector<8x384xf32> to vector<8x384xbf16>
    %c0_43 = arith.constant 0 : index
    %c0_44 = arith.constant 0 : index
    %91 = vector.load %arg14[%c0_43, %c0_44] : memref<384x128xbf16, #tpu.memory_space<vmem>>, vector<384x128xbf16>
    %cst_45 = arith.constant dense<0.000000e+00> : vector<8x128xf32>
    %92 = tpu.matmul %90, %91, %cst_45 {dimension_numbers = #tpu.dot_dimension_numbers<[1], [0], [0], [1], [0, 0, 1, 1], [], []>} : vector<8x384xbf16>, vector<384x128xbf16>, vector<8x128xf32> -> vector<8x128xf32>
    %c0_46 = arith.constant 0 : index
    %c0_47 = arith.constant 0 : index
    %93 = vector.load %arg15[%c0_46, %c0_47] : memref<1x128xf32, #tpu.memory_space<vmem>>, vector<1x128xf32>
    %94 = vector.broadcast %93 : vector<1x128xf32> to vector<8x128xf32>
    %95 = arith.addf %92, %94 : vector<8x128xf32>
    %cst_48 = arith.constant dense<0xFF800000> : vector<8xf32>
    %96 = vector.multi_reduction <maximumf>, %95, %cst_48 [1] : vector<8x128xf32> to vector<8xf32>
    %97 = vector.shape_cast %96 : vector<8xf32> to vector<8x1xf32>
    %98 = vector.broadcast %97 : vector<8x1xf32> to vector<8x128xf32>
    %99 = arith.subf %95, %98 : vector<8x128xf32>
    %100 = math.exp %99 : vector<8x128xf32>
    %cst_49 = arith.constant dense<0.000000e+00> : vector<8xf32>
    %101 = vector.multi_reduction <add>, %100, %cst_49 [1] : vector<8x128xf32> to vector<8xf32>
    %102 = vector.shape_cast %101 : vector<8xf32> to vector<8x1xf32>
    %103 = tpu.reciprocal %102 {approx = true} : vector<8x1xf32> -> vector<8x1xf32>
    %104 = arith.mulf %102, %103 : vector<8x1xf32>
    %cst_50 = arith.constant 2.000000e+00 : f32
    %105 = vector.broadcast %cst_50 : f32 to vector<8x1xf32>
    %106 = arith.subf %105, %104 : vector<8x1xf32>
    %107 = arith.mulf %103, %106 : vector<8x1xf32>
    %108 = vector.broadcast %107 : vector<8x1xf32> to vector<8x128xf32>
    %109 = arith.mulf %100, %108 : vector<8x128xf32>
    %c0_51 = arith.constant 0 : index
    %c0_52 = arith.constant 0 : index
    %110 = vector.load %arg16[%c0_51, %c0_52] : memref<8x128xf32, #tpu.memory_space<vmem>>, vector<8x128xf32>
    tpu.vector_store %arg16[%c0_51, %c0_52], %109 {strides = array<i32>} : memref<8x128xf32, #tpu.memory_space<vmem>>, vector<8x128xf32>,
    return
  }
  func.func @transform_0(%arg0: i32) -> (i32, i32) {
    %c0_i32 = arith.constant 0 : i32
    %c0_i32_0 = arith.constant 0 : i32
    return %arg0, %c0_i32 : i32, i32
  }
  func.func @transform_1(%arg0: i32) -> (i32, i32) {
    %c0_i32 = arith.constant 0 : i32
    %c0_i32_0 = arith.constant 0 : i32
    return %arg0, %c0_i32 : i32, i32
  }
  func.func @transform_2(%arg0: i32) -> (i32, i32) {
    %c0_i32 = arith.constant 0 : i32
    %c0_i32_0 = arith.constant 0 : i32
    %c0_i32_1 = arith.constant 0 : i32
    return %c0_i32, %c0_i32_0 : i32, i32
  }
  func.func @transform_3(%arg0: i32) -> (i32, i32) {
    %c0_i32 = arith.constant 0 : i32
    %c0_i32_0 = arith.constant 0 : i32
    %c0_i32_1 = arith.constant 0 : i32
    return %c0_i32, %c0_i32_0 : i32, i32
  }
  func.func @transform_4(%arg0: i32) -> (i32, i32) {
    %c0_i32 = arith.constant 0 : i32
    %c0_i32_0 = arith.constant 0 : i32
    %c0_i32_1 = arith.constant 0 : i32
    return %c0_i32, %c0_i32_0 : i32, i32
  }
  func.func @transform_5(%arg0: i32) -> (i32, i32) {
    %c0_i32 = arith.constant 0 : i32
    %c0_i32_0 = arith.constant 0 : i32
    %c0_i32_1 = arith.constant 0 : i32
    return %c0_i32, %c0_i32_0 : i32, i32
  }
  func.func @transform_6(%arg0: i32) -> (i32, i32) {
    %c0_i32 = arith.constant 0 : i32
    %c0_i32_0 = arith.constant 0 : i32
    %c0_i32_1 = arith.constant 0 : i32
    return %c0_i32, %c0_i32_0 : i32, i32
  }
  func.func @transform_7(%arg0: i32) -> (i32, i32) {
    %c0_i32 = arith.constant 0 : i32
    %c0_i32_0 = arith.constant 0 : i32
    %c0_i32_1 = arith.constant 0 : i32
    return %c0_i32, %c0_i32_0 : i32, i32
  }
  func.func @transform_8(%arg0: i32) -> (i32, i32) {
    %c0_i32 = arith.constant 0 : i32
    %c0_i32_0 = arith.constant 0 : i32
    %c0_i32_1 = arith.constant 0 : i32
    return %c0_i32, %c0_i32_0 : i32, i32
  }
  func.func @transform_9(%arg0: i32) -> (i32, i32) {
    %c0_i32 = arith.constant 0 : i32
    %c0_i32_0 = arith.constant 0 : i32
    %c0_i32_1 = arith.constant 0 : i32
    return %c0_i32, %c0_i32_0 : i32, i32
  }
  func.func @transform_10(%arg0: i32) -> (i32, i32) {
    %c0_i32 = arith.constant 0 : i32
    %c0_i32_0 = arith.constant 0 : i32
    %c0_i32_1 = arith.constant 0 : i32
    return %c0_i32, %c0_i32_0 : i32, i32
  }
  func.func @transform_11(%arg0: i32) -> (i32, i32) {
    %c0_i32 = arith.constant 0 : i32
    %c0_i32_0 = arith.constant 0 : i32
    %c0_i32_1 = arith.constant 0 : i32
    return %c0_i32, %c0_i32_0 : i32, i32
  }
  func.func @transform_12(%arg0: i32) -> (i32, i32) {
    %c0_i32 = arith.constant 0 : i32
    %c0_i32_0 = arith.constant 0 : i32
    %c0_i32_1 = arith.constant 0 : i32
    return %c0_i32, %c0_i32_0 : i32, i32
  }
  func.func @transform_13(%arg0: i32) -> (i32, i32) {
    %c0_i32 = arith.constant 0 : i32
    %c0_i32_0 = arith.constant 0 : i32
    %c0_i32_1 = arith.constant 0 : i32
    return %c0_i32, %c0_i32_0 : i32, i32
  }
  func.func @transform_14(%arg0: i32) -> (i32, i32) {
    %c0_i32 = arith.constant 0 : i32
    %c0_i32_0 = arith.constant 0 : i32
    %c0_i32_1 = arith.constant 0 : i32
    return %c0_i32, %c0_i32_0 : i32, i32
  }
  func.func @transform_15(%arg0: i32) -> (i32, i32) {
    %c0_i32 = arith.constant 0 : i32
    %c0_i32_0 = arith.constant 0 : i32
    return %arg0, %c0_i32 : i32, i32
  }
}

</mosaic_0001>

<llo_original>
// kernel: critic_forward.1
$region0: #{critic_forward.1}
  #allocation0 [shape = 'u32[]', space=smem, size = 0x4, offset = 0x4, fixed_abs, tag = 'smem constant byte address 0x4 - core index']
  #allocation1 [shape = 'u32[144,128]{1,0:T(1,128)}', space=vmem, size = 0x12000, scoped, tag = 'internal scratch']
  %s0 = inlined_call_operand.hbm [shape: f32[8,11], index: 0, kind: input, shape index: {}]
  %s1 = inlined_call_operand.vmem [shape: f32[8,3], index: 1, kind: input, shape index: {}]
  %s2 = inlined_call_operand.vmem [shape: f32[1,11], index: 2, kind: input, shape index: {}]
  %s3 = inlined_call_operand.hbm [shape: f32[1,11], index: 3, kind: input, shape index: {}]
  %s4 = inlined_call_operand.vmem [shape: bf16[11,512], index: 4, kind: input, shape index: {}]
  %s5 = inlined_call_operand.hbm [shape: bf16[3,512], index: 5, kind: input, shape index: {}]
  %s6 = inlined_call_operand.hbm [shape: f32[1,512], index: 6, kind: input, shape index: {}]
  %s7 = inlined_call_operand.hbm [shape: f32[1,512], index: 7, kind: input, shape index: {}]
  %s8 = inlined_call_operand.hbm [shape: f32[1,512], index: 8, kind: input, shape index: {}]
  %s9 = inlined_call_operand.hbm [shape: bf16[512,384], index: 9, kind: input, shape index: {}]
  %s10 = inlined_call_operand.hbm [shape: f32[1,384], index: 10, kind: input, shape index: {}]
  %s11 = inlined_call_operand.hbm [shape: f32[1,384], index: 11, kind: input, shape index: {}]
  %s12 = inlined_call_operand.hbm [shape: f32[1,384], index: 12, kind: input, shape index: {}]
  %s13 = inlined_call_operand.hbm [shape: bf16[384,128], index: 13, kind: input, shape index: {}]
  %s14 = inlined_call_operand.hbm [shape: f32[1,128], index: 14, kind: input, shape index: {}]
  %s15 = inlined_call_operand.hbm [shape: f32[8,128], index: 15, kind: output, shape index: {}]
  %s16 = sld [smem:[#allocation0]]
  $region118: #{critic_forward.1} parent=0
    _
  %s18 = ssub.s32 1, %s16
  %s19 = scalar_select 0, %s18, %s16
  $region1: #{critic_forward.1} parent=0
    #allocation2 [shape = 'u8[4096]{0}', space=vmem, size = 0x1000, scoped, tag = 'input window, operand 0, single buffered']
    #allocation3 [shape = 's32[1]{0}', space=sflag, size = 0x4, scoped, tag = 'scoped memory for critic_forward.1']
    #allocation4 [shape = 's32[1]{0}', space=sflag, size = 0x4, scoped, tag = 'scoped memory for critic_forward.1']
    #allocation5 [shape = 'u8[512]{0}', space=vmem, size = 0x400, scoped, tag = 'input window, operand 3, single buffered']
    #allocation6 [shape = 's32[1]{0}', space=sflag, size = 0x4, scoped, tag = 'scoped memory for critic_forward.1']
    #allocation7 [shape = 'u8[4096]{0}', space=vmem, size = 0x1000, scoped, tag = 'input window, operand 5, single buffered']
    #allocation8 [shape = 'u8[2048]{0}', space=vmem, size = 0x800, scoped, tag = 'input window, operand 6, single buffered']
    #allocation9 [shape = 's32[1]{0}', space=sflag, size = 0x4, scoped, tag = 'scoped memory for critic_forward.1']
    #allocation10 [shape = 'u8[2048]{0}', space=vmem, size = 0x800, scoped, tag = 'input window, operand 7, single buffered']
    #allocation11 [shape = 'u8[2048]{0}', space=vmem, size = 0x800, scoped, tag = 'input window, operand 8, single buffered']
    #allocation12 [shape = 's32[1]{0}', space=sflag, size = 0x4, scoped, tag = 'scoped memory for critic_forward.1']
    #allocation13 [shape = 'u8[393216]{0}', space=vmem, size = 0x60000, scoped, tag = 'input window, operand 9, single buffered']
    #allocation14 [shape = 'u8[1536]{0}', space=vmem, size = 0x800, scoped, tag = 'input window, operand 10, single buffered']
    #allocation15 [shape = 's32[1]{0}', space=sflag, size = 0x4, scoped, tag = 'scoped memory for critic_forward.1']
    #allocation16 [shape = 'u8[1536]{0}', space=vmem, size = 0x800, scoped, tag = 'input window, operand 11, single buffered']
    #allocation17 [shape = 'u8[1536]{0}', space=vmem, size = 0x800, scoped, tag = 'input window, operand 12, single buffered']
    #allocation18 [shape = 's32[1]{0}', space=sflag, size = 0x4, scoped, tag = 'scoped memory for critic_forward.1']
    #allocation19 [shape = 'u8[98304]{0}', space=vmem, size = 0x18000, scoped, tag = 'input window, operand 13, single buffered']
    #allocation20 [shape = 'u8[512]{0}', space=vmem, size = 0x400, scoped, tag = 'input window, operand 14, single buffered']
    #allocation21 [shape = 's32[1]{0}', space=sflag, size = 0x4, scoped, tag = 'scoped memory for critic_forward.1']
    #allocation22 [shape = 'u8[4096]{0}', space=vmem, size = 0x1000, scoped, tag = 'output window, operand 0, single buffered']
    %20 = vsyncpa [#allocation3], 0
    %21 = vsyncpa [#allocation6], 0
    %22 = vsyncpa [#allocation9], 0
    %23 = vsyncpa [#allocation12], 0
    %24 = vsyncpa [#allocation15], 0
    %25 = vsyncpa [#allocation18], 0
    %26 = vsyncpa [#allocation21], 0
    %27 = vsyncpa [#allocation4], 0
    // Predicated region
    $region2: #{critic_forward.1} parent=1 // pred_check
      _
    $region3: #{critic_forward.1} parent=1 // pred_check_branch
      %29 = sbr.rel (0) target = $region5
    $region4: #{critic_forward.1} parent=1 // pred_region
      %s31 = ssub.s32 128, 128
      %32 = vsyncadd [#allocation3], %s31
      %s34 = sshll.u32 [#allocation2], 4
      %s35 = int_to_ptr.vmem [resolvable:$true] %s34
      %37 = dma.hbm_to_vmem [thread:$0]  %s0, 128, %s35, [#allocation3]
    $region5: #{critic_forward.1} parent=1 // pred_fallthru
      _
    // Predicated region
    $region6: #{critic_forward.1} parent=1 // pred_check
      _
    $region7: #{critic_forward.1} parent=1 // pred_check_branch
      %39 = sbr.rel (0) target = $region9
    $region8: #{critic_forward.1} parent=1 // pred_region
      _
    $region9: #{critic_forward.1} parent=1 // pred_fallthru
      _
    // Predicated region
    $region10: #{critic_forward.1} parent=1 // pred_check
      _
    $region11: #{critic_forward.1} parent=1 // pred_check_branch
      %41 = sbr.rel (0) target = $region13
    $region12: #{critic_forward.1} parent=1 // pred_region
      _
    $region13: #{critic_forward.1} parent=1 // pred_fallthru
      _
    // Predicated region
    $region14: #{critic_forward.1} parent=1 // pred_check
      _
    $region15: #{critic_forward.1} parent=1 // pred_check_branch
      %43 = sbr.rel (0) target = $region17
    $region16: #{critic_forward.1} parent=1 // pred_region
      %s45 = ssub.s32 16, 16
      %46 = vsyncadd [#allocation6], %s45
      %s48 = sshll.u32 [#allocation5], 4
      %s49 = int_to_ptr.vmem [resolvable:$true] %s48
      %51 = dma.hbm_to_vmem [thread:$0]  %s3, 16, %s49, [#allocation6]
    $region17: #{critic_forward.1} parent=1 // pred_fallthru
      _
    // Predicated region
    $region18: #{critic_forward.1} parent=1 // pred_check
      _
    $region19: #{critic_forward.1} parent=1 // pred_check_branch
      %53 = sbr.rel (0) target = $region21
    $region20: #{critic_forward.1} parent=1 // pred_region
      _
    $region21: #{critic_forward.1} parent=1 // pred_fallthru
      _
    // Predicated region
    $region22: #{critic_forward.1} parent=1 // pred_check
      _
    $region23: #{critic_forward.1} parent=1 // pred_check_branch
      %55 = sbr.rel (0) target = $region25
    $region24: #{critic_forward.1} parent=1 // pred_region
      %s57 = ssub.s32 128, 128
      %58 = vsyncadd [#allocation6], %s57
      %s60 = sshll.u32 [#allocation7], 4
      %s61 = int_to_ptr.vmem [resolvable:$true] %s60
      %63 = dma.hbm_to_vmem [thread:$0]  %s5, 128, %s61, [#allocation6]
    $region25: #{critic_forward.1} parent=1 // pred_fallthru
      _
    // Predicated region
    $region26: #{critic_forward.1} parent=1 // pred_check
      _
    $region27: #{critic_forward.1} parent=1 // pred_check_branch
      %65 = sbr.rel (0) target = $region29
    $region28: #{critic_forward.1} parent=1 // pred_region
      %s67 = ssub.s32 64, 64
      %68 = vsyncadd [#allocation9], %s67
      %s70 = sshll.u32 [#allocation8], 4
      %s71 = int_to_ptr.vmem [resolvable:$true] %s70
      %73 = dma.hbm_to_vmem [thread:$0]  %s6, 64, %s71, [#allocation9]
    $region29: #{critic_forward.1} parent=1 // pred_fallthru
      _
    // Predicated region
    $region30: #{critic_forward.1} parent=1 // pred_check
      _
    $region31: #{critic_forward.1} parent=1 // pred_check_branch
      %75 = sbr.rel (0) target = $region33
    $region32: #{critic_forward.1} parent=1 // pred_region
      %s77 = ssub.s32 64, 64
      %78 = vsyncadd [#allocation9], %s77
      %s80 = sshll.u32 [#allocation10], 4
      %s81 = int_to_ptr.vmem [resolvable:$true] %s80
      %83 = dma.hbm_to_vmem [thread:$0]  %s7, 64, %s81, [#allocation9]
    $region33: #{critic_forward.1} parent=1 // pred_fallthru
      _
    // Predicated region
    $region34: #{critic_forward.1} parent=1 // pred_check
      _
    $region35: #{critic_forward.1} parent=1 // pred_check_branch
      %85 = sbr.rel (0) target = $region37
    $region36: #{critic_forward.1} parent=1 // pred_region
      %s87 = ssub.s32 64, 64
      %88 = vsyncadd [#allocation12], %s87
      %s90 = sshll.u32 [#allocation11], 4
      %s91 = int_to_ptr.vmem [resolvable:$true] %s90
      %93 = dma.hbm_to_vmem [thread:$0]  %s8, 64, %s91, [#allocation12]
    $region37: #{critic_forward.1} parent=1 // pred_fallthru
      _
    // Predicated region
    $region38: #{critic_forward.1} parent=1 // pred_check
      _
    $region39: #{critic_forward.1} parent=1 // pred_check_branch
      %95 = sbr.rel (0) target = $region41
    $region40: #{critic_forward.1} parent=1 // pred_region
      %s97 = ssub.s32 12288, 12288
      %98 = vsyncadd [#allocation12], %s97
      %s99 = sshll.u32 [#allocation13], 4
      %s100 = int_to_ptr.vmem [resolvable:$true] %s99
      %105 = dma.hbm_to_vmem [thread:$0]  %s9, 12288, %s100, [#allocation12], 192, 192, 12
    $region41: #{critic_forward.1} parent=1 // pred_fallthru
      _
    // Predicated region
    $region42: #{critic_forward.1} parent=1 // pred_check
      _
    $region43: #{critic_forward.1} parent=1 // pred_check_branch
      %107 = sbr.rel (0) target = $region45
    $region44: #{critic_forward.1} parent=1 // pred_region
      %s109 = ssub.s32 48, 48
      %110 = vsyncadd [#allocation15], %s109
      %s112 = sshll.u32 [#allocation14], 4
      %s113 = int_to_ptr.vmem [resolvable:$true] %s112
      %115 = dma.hbm_to_vmem [thread:$0]  %s10, 48, %s113, [#allocation15]
    $region45: #{critic_forward.1} parent=1 // pred_fallthru
      _
    // Predicated region
    $region46: #{critic_forward.1} parent=1 // pred_check
      _
    $region47: #{critic_forward.1} parent=1 // pred_check_branch
      %117 = sbr.rel (0) target = $region49
    $region48: #{critic_forward.1} parent=1 // pred_region
      %s119 = ssub.s32 48, 48
      %120 = vsyncadd [#allocation15], %s119
      %s122 = sshll.u32 [#allocation16], 4
      %s123 = int_to_ptr.vmem [resolvable:$true] %s122
      %125 = dma.hbm_to_vmem [thread:$0]  %s11, 48, %s123, [#allocation15]
    $region49: #{critic_forward.1} parent=1 // pred_fallthru
      _
    // Predicated region
    $region50: #{critic_forward.1} parent=1 // pred_check
      _
    $region51: #{critic_forward.1} parent=1 // pred_check_branch
      %127 = sbr.rel (0) target = $region53
    $region52: #{critic_forward.1} parent=1 // pred_region
      %s129 = ssub.s32 48, 48
      %130 = vsyncadd [#allocation18], %s129
      %s132 = sshll.u32 [#allocation17], 4
      %s133 = int_to_ptr.vmem [resolvable:$true] %s132
      %135 = dma.hbm_to_vmem [thread:$0]  %s12, 48, %s133, [#allocation18]
    $region53: #{critic_forward.1} parent=1 // pred_fallthru
      _
    // Predicated region
    $region54: #{critic_forward.1} parent=1 // pred_check
      _
    $region55: #{critic_forward.1} parent=1 // pred_check_branch
      %137 = sbr.rel (0) target = $region57
    $region56: #{critic_forward.1} parent=1 // pred_region
      %s139 = ssub.s32 3072, 3072
      %140 = vsyncadd [#allocation18], %s139
      %s141 = sshll.u32 [#allocation19], 4
      %s142 = int_to_ptr.vmem [resolvable:$true] %s141
      %147 = dma.hbm_to_vmem [thread:$0]  %s13, 3072, %s142, [#allocation18], 64, 64, 4
    $region57: #{critic_forward.1} parent=1 // pred_fallthru
      _
    // Predicated region
    $region58: #{critic_forward.1} parent=1 // pred_check
      _
    $region59: #{critic_forward.1} parent=1 // pred_check_branch
      %149 = sbr.rel (0) target = $region61
    $region60: #{critic_forward.1} parent=1 // pred_region
      %s151 = ssub.s32 16, 16
      %152 = vsyncadd [#allocation21], %s151
      %s154 = sshll.u32 [#allocation20], 4
      %s155 = int_to_ptr.vmem [resolvable:$true] %s154
      %157 = dma.hbm_to_vmem [thread:$0]  %s14, 16, %s155, [#allocation21]
    $region61: #{critic_forward.1} parent=1 // pred_fallthru
      _
    // Predicated region
    $region62: #{critic_forward.1} parent=1 // pred_check
      _
    $region63: #{critic_forward.1} parent=1 // pred_check_branch
      %159 = sbr.rel (0) target = $region65
    $region64: #{critic_forward.1} parent=1 // pred_region
      %160 = dma.done [#allocation3], 128
    $region65: #{critic_forward.1} parent=1 // pred_fallthru
      _
    // Predicated region
    $region66: #{critic_forward.1} parent=1 // pred_check
      _
    $region67: #{critic_forward.1} parent=1 // pred_check_branch
      %162 = sbr.rel (0) target = $region69
    $region68: #{critic_forward.1} parent=1 // pred_region
      %163 = dma.done [#allocation6], 16
    $region69: #{critic_forward.1} parent=1 // pred_fallthru
      _
    // Predicated region
    $region70: #{critic_forward.1} parent=1 // pred_check
      _
    $region71: #{critic_forward.1} parent=1 // pred_check_branch
      %165 = sbr.rel (0) target = $region73
    $region72: #{critic_forward.1} parent=1 // pred_region
      %166 = dma.done [#allocation6], 128
    $region73: #{critic_forward.1} parent=1 // pred_fallthru
      _
    // Predicated region
    $region74: #{critic_forward.1} parent=1 // pred_check
      _
    $region75: #{critic_forward.1} parent=1 // pred_check_branch
      %168 = sbr.rel (0) target = $region77
    $region76: #{critic_forward.1} parent=1 // pred_region
      %169 = dma.done [#allocation9], 64
    $region77: #{critic_forward.1} parent=1 // pred_fallthru
      _
    // Predicated region
    $region78: #{critic_forward.1} parent=1 // pred_check
      _
    $region79: #{critic_forward.1} parent=1 // pred_check_branch
      %171 = sbr.rel (0) target = $region81
    $region80: #{critic_forward.1} parent=1 // pred_region
      %172 = dma.done [#allocation9], 64
    $region81: #{critic_forward.1} parent=1 // pred_fallthru
      _
    // Predicated region
    $region82: #{critic_forward.1} parent=1 // pred_check
      _
    $region83: #{critic_forward.1} parent=1 // pred_check_branch
      %174 = sbr.rel (0) target = $region85
    $region84: #{critic_forward.1} parent=1 // pred_region
      %175 = dma.done [#allocation12], 64
    $region85: #{critic_forward.1} parent=1 // pred_fallthru
      _
    // Predicated region
    $region86: #{critic_forward.1} parent=1 // pred_check
      _
    $region87: #{critic_forward.1} parent=1 // pred_check_branch
      %177 = sbr.rel (0) target = $region89
    $region88: #{critic_forward.1} parent=1 // pred_region
      %178 = dma.done [#allocation12], 12288
    $region89: #{critic_forward.1} parent=1 // pred_fallthru
      _
    // Predicated region
    $region90: #{critic_forward.1} parent=1 // pred_check
      _
    $region91: #{critic_forward.1} parent=1 // pred_check_branch
      %180 = sbr.rel (0) target = $region93
    $region92: #{critic_forward.1} parent=1 // pred_region
      %181 = dma.done [#allocation15], 48
    $region93: #{critic_forward.1} parent=1 // pred_fallthru
      _
    // Predicated region
    $region94: #{critic_forward.1} parent=1 // pred_check
      _
    $region95: #{critic_forward.1} parent=1 // pred_check_branch
      %183 = sbr.rel (0) target = $region97
    $region96: #{critic_forward.1} parent=1 // pred_region
      %184 = dma.done [#allocation15], 48
    $region97: #{critic_forward.1} parent=1 // pred_fallthru
      _
    // Predicated region
    $region98: #{critic_forward.1} parent=1 // pred_check
      _
    $region99: #{critic_forward.1} parent=1 // pred_check_branch
      %186 = sbr.rel (0) target = $region101
    $region100: #{critic_forward.1} parent=1 // pred_region
      %187 = dma.done [#allocation18], 48
    $region101: #{critic_forward.1} parent=1 // pred_fallthru
      _
    // Predicated region
    $region102: #{critic_forward.1} parent=1 // pred_check
      _
    $region103: #{critic_forward.1} parent=1 // pred_check_branch
      %189 = sbr.rel (0) target = $region105
    $region104: #{critic_forward.1} parent=1 // pred_region
      %190 = dma.done [#allocation18], 3072
    $region105: #{critic_forward.1} parent=1 // pred_fallthru
      _
    // Predicated region
    $region106: #{critic_forward.1} parent=1 // pred_check
      _
    $region107: #{critic_forward.1} parent=1 // pred_check_branch
      %192 = sbr.rel (0) target = $region109
    $region108: #{critic_forward.1} parent=1 // pred_region
      %193 = dma.done [#allocation21], 16
    $region109: #{critic_forward.1} parent=1 // pred_fallthru
      _
    %v195 = vld [vmem:[#allocation2] sm:$0xff]
    %v196 = vld [vmem:[%s2] sm:$0x1]
    %v198 = vlaneseq
    %v199 = vshrl.u32 %v198, 7
    %v200 = vsub.s32 0, %v199
    %v201 = vrot.slane %v196, %v200
    %v203 = vsub.f32 %v195, %v201
    %v204 = vld [vmem:[#allocation5] sm:$0x1]
    %v206 = vlaneseq
    %v207 = vshrl.u32 %v206, 7
    %v208 = vsub.s32 0, %v207
    %v209 = vrot.slane %v204, %v208
    %v211 = vmul.f32 %v203, %v209
    %v212 = vmax.f32 %v211, -5.0
    %v213 = vmin.f32 %v212, 5.0
    %v214 = vld [vmem:[%s1] sm:$0xff]
    %v215 = vpack.c.bf16 %v213, %v213
    %v216 = vld [vmem:[%s4] sm:$0xff]
    %v217 = vld [vmem:[%s4 + $0x8] sm:$0xff]
    %v218 = vld [vmem:[%s4 + $0x10] sm:$0x33]
    %v219 = vld [vmem:[%s4 + $0x18] sm:$0x33]
    %v220 = vpack.c.bf16 %v214, %v214
    %v221 = vld [vmem:[#allocation7] sm:$0xff]
    %v223 = vcombine.high %v221, %v221
    %v225 = vunpack.c.l.s4 1983009808
    %v226 = vunpack.c.0.s8 %v225
    %v227 = vlaneseq
    %v228 = vshrl.u32 %v227, 7
    %v229 = vsub.s32 %v226, %v228
    %v230 = vrot.slane %v221, %v229
    %v232 = vunpack.c.l.s4 1983009808
    %v233 = vunpack.c.0.s8 %v232
    %v234 = vlaneseq
    %v235 = vshrl.u32 %v234, 7
    %v236 = vsub.s32 %v233, %v235
    %v237 = vrot.slane %v223, %v236
    %v238 = vcombine.high %v230, %v230
    %v239 = vcombine.high %v237, %v237
    %vm240 = vcmask 23552
    %v242 = vsel %vm240, %v220, 0
    %vm244 = vcmask 1040384
    %vm245 = vcmask 1041408
    %v246 = vsel %vm244, 4294967295, 65535
    %v247 = vsel %vm245, %v246, 0
    %v249 = vand.u32 %v230, %v247
    %v252 = vand.u32 %v238, %v247
    %v255 = vand.u32 %v237, %v247
    %v258 = vand.u32 %v239, %v247
    %260 = vmatprep.subr.bf16.mxu0 0
    %261 = vmatpush1.bf16.msra.mxu0 0
    %262 = vmatprep.subr.bf16.mxu0 0
    %263 = vmatpush1.bf16.msra.mxu0 0
    %264 = vmatprep.subr.bf16.mxu0 0
    %265 = vmatpush1.bf16.msra.mxu0 0
    %266 = vmatprep.subr.bf16.mxu0 0
    %267 = vmatpush1.bf16.msra.mxu0 0
    %268 = vmatprep.subr.bf16.mxu0 0
    %269 = vmatpush1.bf16.msra.mxu0 0
    %270 = vmatprep.subr.bf16.mxu0 0
    %271 = vmatpush1.bf16.msra.mxu0 0
    %272 = vmatprep.subr.bf16.mxu0 0
    %273 = vmatpush1.bf16.msra.mxu0 0
    %274 = vmatprep.subr.bf16.mxu0 %v252
    %275 = vmatpush1.bf16.msra.mxu0 %v249
    %276 = vmatprep.subr.bf16.mxu0 0
    %277 = vmatpush2.bf16.msra.mxu0 0
    %278 = vmatprep.subr.bf16.mxu0 0
    %279 = vmatpush2.bf16.msra.mxu0 0
    %280 = vmatprep.subr.bf16.mxu0 0
    %281 = vmatpush2.bf16.msra.mxu0 0
    %282 = vmatprep.subr.bf16.mxu0 0
    %283 = vmatpush2.bf16.msra.mxu0 0
    %284 = vmatprep.subr.bf16.mxu0 0
    %285 = vmatpush2.bf16.msra.mxu0 0
    %286 = vmatprep.subr.bf16.mxu0 0
    %287 = vmatpush2.bf16.msra.mxu0 0
    %288 = vmatprep.subr.bf16.mxu0 0
    %289 = vmatpush2.bf16.msra.mxu0 0
    %290 = vmatprep.subr.bf16.mxu0 0
    %291 = vmatpush2.bf16.msra.mxu0 0
    %292 = vmatprep.mubr.bf16.mxu0 0
    %293 = vmatmul.mubr.bf16.gmra.mxu0 %v242
    %v294 = vpop.f32.mrf.mxu0
    %v295 = vadd.f32 0.0, %v294
    %v296 = vpop.f32.mrf.mxu0
    %v297 = vadd.f32 0.0, %v296
    %v298 = vpop.f32.mrf.mxu0
    %v299 = vpop.f32.mrf.mxu0
    %300 = vdwg.mxu0
    %301 = vmatprep.subr.bf16.mxu0 0
    %302 = vmatpush1.bf16.msra.mxu0 0
    %303 = vmatprep.subr.bf16.mxu0 0
    %304 = vmatpush1.bf16.msra.mxu0 0
    %305 = vmatprep.subr.bf16.mxu0 0
    %306 = vmatpush1.bf16.msra.mxu0 0
    %307 = vmatprep.subr.bf16.mxu0 0
    %308 = vmatpush1.bf16.msra.mxu0 0
    %309 = vmatprep.subr.bf16.mxu0 0
    %310 = vmatpush1.bf16.msra.mxu0 0
    %311 = vmatprep.subr.bf16.mxu0 0
    %312 = vmatpush1.bf16.msra.mxu0 0
    %313 = vmatprep.subr.bf16.mxu0 0
    %314 = vmatpush1.bf16.msra.mxu0 0
    %315 = vmatprep.subr.bf16.mxu0 %v258
    %316 = vmatpush1.bf16.msra.mxu0 %v255
    %317 = vmatprep.subr.bf16.mxu0 0
    %318 = vmatpush2.bf16.msra.mxu0 0
    %319 = vmatprep.subr.bf16.mxu0 0
    %320 = vmatpush2.bf16.msra.mxu0 0
    %321 = vmatprep.subr.bf16.mxu0 0
    %322 = vmatpush2.bf16.msra.mxu0 0
    %323 = vmatprep.subr.bf16.mxu0 0
    %324 = vmatpush2.bf16.msra.mxu0 0
    %325 = vmatprep.subr.bf16.mxu0 0
    %326 = vmatpush2.bf16.msra.mxu0 0
    %327 = vmatprep.subr.bf16.mxu0 0
    %328 = vmatpush2.bf16.msra.mxu0 0
    %329 = vmatprep.subr.bf16.mxu0 0
    %330 = vmatpush2.bf16.msra.mxu0 0
    %331 = vmatprep.subr.bf16.mxu0 0
    %332 = vmatpush2.bf16.msra.mxu0 0
    %333 = vmatprep.mubr.bf16.mxu0 0
    %334 = vmatmul.mubr.bf16.gmra.mxu0 %v242
    %v335 = vpop.f32.mrf.mxu0
    %v336 = vadd.f32 0.0, %v335
    %v337 = vpop.f32.mrf.mxu0
    %v338 = vadd.f32 0.0, %v337
    %v339 = vpop.f32.mrf.mxu0
    %v340 = vpop.f32.mrf.mxu0
    %341 = vdwg.mxu0
    %v346 = vunpack.c.l.b16 %v216
    %v347 = vunpack.c.h.b16 %v216
    %v348 = vunpack.c.l.b16 %v217
    %v349 = vunpack.c.h.b16 %v217
    %v350 = vunpack.c.l.b16 %v218
    %v351 = vunpack.c.h.b16 %v218
    %v352 = vunpack.c.l.b16 %v219
    %v353 = vunpack.c.h.b16 %v219
    %v354 = vpack.c.b16 %v350, %v346
    %v355 = vpack.c.b16 %v351, %v347
    %v356 = vpack.c.b16 %v352, %v348
    %v357 = vpack.c.b16 %v353, %v349
    %vm358 = vcmask 89088
    %v360 = vsel %vm358, %v215, 0
    %vm362 = vcmask 1044480
    %vm363 = vcmask 1045504
    %v364 = vsel %vm362, 4294967295, 65535
    %v365 = vsel %vm363, %v364, 0
    %v367 = vand.u32 %v354, %v365
    %v370 = vand.u32 %v355, %v365
    %v373 = vand.u32 %v356, %v365
    %v376 = vand.u32 %v357, %v365
    %378 = vmatprep.subr.bf16.mxu0 0
    %379 = vmatpush1.bf16.msra.mxu0 0
    %380 = vmatprep.subr.bf16.mxu0 0
    %381 = vmatpush1.bf16.msra.mxu0 0
    %382 = vmatprep.subr.bf16.mxu0 0
    %383 = vmatpush1.bf16.msra.mxu0 0
    %384 = vmatprep.subr.bf16.mxu0 0
    %385 = vmatpush1.bf16.msra.mxu0 0
    %386 = vmatprep.subr.bf16.mxu0 0
    %387 = vmatpush1.bf16.msra.mxu0 0
    %388 = vmatprep.subr.bf16.mxu0 0
    %389 = vmatpush1.bf16.msra.mxu0 0
    %390 = vmatprep.subr.bf16.mxu0 0
    %391 = vmatpush1.bf16.msra.mxu0 0
    %392 = vmatprep.subr.bf16.mxu0 %v370
    %393 = vmatpush1.bf16.msra.mxu0 %v367
    %394 = vmatprep.subr.bf16.mxu0 0
    %395 = vmatpush2.bf16.msra.mxu0 0
    %396 = vmatprep.subr.bf16.mxu0 0
    %397 = vmatpush2.bf16.msra.mxu0 0
    %398 = vmatprep.subr.bf16.mxu0 0
    %399 = vmatpush2.bf16.msra.mxu0 0
    %400 = vmatprep.subr.bf16.mxu0 0
    %401 = vmatpush2.bf16.msra.mxu0 0
    %402 = vmatprep.subr.bf16.mxu0 0
    %403 = vmatpush2.bf16.msra.mxu0 0
    %404 = vmatprep.subr.bf16.mxu0 0
    %405 = vmatpush2.bf16.msra.mxu0 0
    %406 = vmatprep.subr.bf16.mxu0 0
    %407 = vmatpush2.bf16.msra.mxu0 0
    %408 = vmatprep.subr.bf16.mxu0 0
    %409 = vmatpush2.bf16.msra.mxu0 0
    %410 = vmatprep.mubr.bf16.mxu0 0
    %411 = vmatmul.mubr.bf16.gmra.mxu0 %v360
    %v412 = vpop.f32.mrf.mxu0
    %v413 = vadd.f32 %v295, %v412
    %v414 = vpop.f32.mrf.mxu0
    %v415 = vadd.f32 %v297, %v414
    %v416 = vpop.f32.mrf.mxu0
    %v417 = vpop.f32.mrf.mxu0
    %418 = vdwg.mxu0
    %419 = vmatprep.subr.bf16.mxu0 0
    %420 = vmatpush1.bf16.msra.mxu0 0
    %421 = vmatprep.subr.bf16.mxu0 0
    %422 = vmatpush1.bf16.msra.mxu0 0
    %423 = vmatprep.subr.bf16.mxu0 0
    %424 = vmatpush1.bf16.msra.mxu0 0
    %425 = vmatprep.subr.bf16.mxu0 0
    %426 = vmatpush1.bf16.msra.mxu0 0
    %427 = vmatprep.subr.bf16.mxu0 0
    %428 = vmatpush1.bf16.msra.mxu0 0
    %429 = vmatprep.subr.bf16.mxu0 0
    %430 = vmatpush1.bf16.msra.mxu0 0
    %431 = vmatprep.subr.bf16.mxu0 0
    %432 = vmatpush1.bf16.msra.mxu0 0
    %433 = vmatprep.subr.bf16.mxu0 %v376
    %434 = vmatpush1.bf16.msra.mxu0 %v373
    %435 = vmatprep.subr.bf16.mxu0 0
    %436 = vmatpush2.bf16.msra.mxu0 0
    %437 = vmatprep.subr.bf16.mxu0 0
    %438 = vmatpush2.bf16.msra.mxu0 0
    %439 = vmatprep.subr.bf16.mxu0 0
    %440 = vmatpush2.bf16.msra.mxu0 0
    %441 = vmatprep.subr.bf16.mxu0 0
    %442 = vmatpush2.bf16.msra.mxu0 0
    %443 = vmatprep.subr.bf16.mxu0 0
    %444 = vmatpush2.bf16.msra.mxu0 0
    %445 = vmatprep.subr.bf16.mxu0 0
    %446 = vmatpush2.bf16.msra.mxu0 0
    %447 = vmatprep.subr.bf16.mxu0 0
    %448 = vmatpush2.bf16.msra.mxu0 0
    %449 = vmatprep.subr.bf16.mxu0 0
    %450 = vmatpush2.bf16.msra.mxu0 0
    %451 = vmatprep.mubr.bf16.mxu0 0
    %452 = vmatmul.mubr.bf16.gmra.mxu0 %v360
    %v453 = vpop.f32.mrf.mxu0
    %v454 = vadd.f32 %v336, %v453
    %v455 = vpop.f32.mrf.mxu0
    %v456 = vadd.f32 %v338, %v455
    %v457 = vpop.f32.mrf.mxu0
    %v458 = vpop.f32.mrf.mxu0
    %459 = vdwg.mxu0
    %v460 = vld [vmem:[#allocation8] sm:$0xf]
    %v462 = vlaneseq
    %v463 = vshrl.u32 %v462, 7
    %v464 = vsub.s32 0, %v463
    %v465 = vrot.slane %v460, %v464
    %v466 = vlaneseq
    %v467 = vshrl.u32 %v466, 7
    %v468 = vsub.s32 1, %v467
    %v469 = vrot.slane %v460, %v468
    %v470 = vlaneseq
    %v471 = vshrl.u32 %v470, 7
    %v472 = vsub.s32 2, %v471
    %v473 = vrot.slane %v460, %v472
    %v474 = vlaneseq
    %v475 = vshrl.u32 %v474, 7
    %v476 = vsub.s32 3, %v475
    %v477 = vrot.slane %v460, %v476
    %v482 = vadd.f32 %v413, %v465
    %v483 = vadd.f32 %v415, %v469
    %v484 = vadd.f32 %v454, %v473
    %v485 = vadd.f32 %v456, %v477
    %v486 = vlaneseq
    %v487 = vand.u32 %v486, 127
    %v488 = vadd.s32 %v487, 128
    %v489 = vadd.s32 %v487, 256
    %v490 = vadd.s32 %v487, 384
    %vm491 = vcmp.lt.s32.totalorder %v487, 400
    %vm492 = vcmp.lt.s32.totalorder %v488, 400
    %vm493 = vcmp.lt.s32.totalorder %v489, 400
    %vm494 = vcmp.lt.s32.totalorder %v490, 400
    %v495 = vadd.f32 %v482, %v483
    %v496 = vadd.f32 %v495, %v484
    %v497 = vadd.f32 %v496, %v485
    %498 = vadd.xlane.f32.xlu0 %v497
    %v499 = vpop.xlane.xlu0 %498
    %v500 = vmul.f32 %v499, 0.0025
    %v501 = vsub.f32 %v482, %v500
    %v502 = vsub.f32 %v483, %v500
    %v503 = vsub.f32 %v484, %v500
    %v504 = vsub.f32 %v485, %v500
    %v505 = vsel %vm491, 1, 0
    %v506 = vsel %vm492, 1, 0
    %v507 = vsel %vm493, 1, 0
    %v508 = vsel %vm494, 1, 0
    %vm509 = vcmp.eq.s32.totalorder %v505, 1
    %vm510 = vcmp.eq.s32.totalorder %v506, 1
    %vm511 = vcmp.eq.s32.totalorder %v507, 1
    %vm512 = vcmp.eq.s32.totalorder %v508, 1
    %v513 = vsel %vm509, %v501, 0.0
    %v514 = vsel %vm510, %v502, 0.0
    %v515 = vsel %vm511, %v503, 0.0
    %v516 = vsel %vm512, %v504, 0.0
    %v517 = vmul.f32 %v513, %v513
    %v518 = vmul.f32 %v514, %v514
    %v519 = vmul.f32 %v515, %v515
    %v520 = vmul.f32 %v516, %v516
    %v521 = vadd.f32 %v517, %v518
    %v522 = vadd.f32 %v521, %v519
    %v523 = vadd.f32 %v522, %v520
    %524 = vadd.xlane.f32.xlu0 %v523
    %v525 = vpop.xlane.xlu0 %524
    %v526 = vmul.f32 %v525, 0.0025
    %v527 = vadd.f32 %v526, 1e-05
    %v528 = vrsqrt.pop %v527
    %v529 = vmul.f32 %v513, %v528
    %v530 = vmul.f32 %v514, %v528
    %v531 = vmul.f32 %v515, %v528
    %v532 = vmul.f32 %v516, %v528
    %v533 = vld [vmem:[#allocation10] sm:$0xf]
    %v535 = vlaneseq
    %v536 = vshrl.u32 %v535, 7
    %v537 = vsub.s32 0, %v536
    %v538 = vrot.slane %v533, %v537
    %v539 = vlaneseq
    %v540 = vshrl.u32 %v539, 7
    %v541 = vsub.s32 1, %v540
    %v542 = vrot.slane %v533, %v541
    %v543 = vlaneseq
    %v544 = vshrl.u32 %v543, 7
    %v545 = vsub.s32 2, %v544
    %v546 = vrot.slane %v533, %v545
    %v547 = vlaneseq
    %v548 = vshrl.u32 %v547, 7
    %v549 = vsub.s32 3, %v548
    %v550 = vrot.slane %v533, %v549
    %v555 = vmul.f32 %v529, %v538
    %v556 = vmul.f32 %v530, %v542
    %v557 = vmul.f32 %v531, %v546
    %v558 = vmul.f32 %v532, %v550
    %v559 = vld [vmem:[#allocation11] sm:$0xf]
    %v561 = vlaneseq
    %v562 = vshrl.u32 %v561, 7
    %v563 = vsub.s32 0, %v562
    %v564 = vrot.slane %v559, %v563
    %v565 = vlaneseq
    %v566 = vshrl.u32 %v565, 7
    %v567 = vsub.s32 1, %v566
    %v568 = vrot.slane %v559, %v567
    %v569 = vlaneseq
    %v570 = vshrl.u32 %v569, 7
    %v571 = vsub.s32 2, %v570
    %v572 = vrot.slane %v559, %v571
    %v573 = vlaneseq
    %v574 = vshrl.u32 %v573, 7
    %v575 = vsub.s32 3, %v574
    %v576 = vrot.slane %v559, %v575
    %v581 = vadd.f32 %v555, %v564
    %v582 = vadd.f32 %v556, %v568
    %v583 = vadd.f32 %v557, %v572
    %v584 = vadd.f32 %v558, %v576
    %v585 = vmax.f32 %v581, 0.0
    %v586 = vmax.f32 %v582, 0.0
    %v587 = vmax.f32 %v583, 0.0
    %v588 = vmax.f32 %v584, 0.0
    %v589 = vpack.c.bf16 %v585, %v585
    %v590 = vpack.c.bf16 %v586, %v586
    %v591 = vpack.c.bf16 %v587, %v587
    %v592 = vpack.c.bf16 %v588, %v588
    %v593 = vld [vmem:[#allocation13] sm:$0xff]
    %v594 = vld [vmem:[#allocation13 + $0x8] sm:$0xf]
    %v595 = vld [vmem:[#allocation13 + $0xc] sm:$0xff]
    %v596 = vld [vmem:[#allocation13 + $0x14] sm:$0xf]
    %v597 = vld [vmem:[#allocation13 + $0x18] sm:$0xff]
    %v598 = vld [vmem:[#allocation13 + $0x20] sm:$0xf]
    %v599 = vld [vmem:[#allocation13 + $0x24] sm:$0xff]
    %v600 = vld [vmem:[#allocation13 + $0x2c] sm:$0xf]
    %v601 = vld [vmem:[#allocation13 + $0x30] sm:$0xff]
    %v602 = vld [vmem:[#allocation13 + $0x38] sm:$0xf]
    %v603 = vld [vmem:[#allocation13 + $0x3c] sm:$0xff]
    %v604 = vld [vmem:[#allocation13 + $0x44] sm:$0xf]
    %v605 = vld [vmem:[#allocation13 + $0x48] sm:$0xff]
    %v606 = vld [vmem:[#allocation13 + $0x50] sm:$0xf]
    %v607 = vld [vmem:[#allocation13 + $0x54] sm:$0xff]
    %v608 = vld [vmem:[#allocation13 + $0x5c] sm:$0xf]
    %v609 = vld [vmem:[#allocation13 + $0x60] sm:$0xff]
    %v610 = vld [vmem:[#allocation13 + $0x68] sm:$0xf]
    %v611 = vld [vmem:[#allocation13 + $0x6c] sm:$0xff]
    %v612 = vld [vmem:[#allocation13 + $0x74] sm:$0xf]
    %v613 = vld [vmem:[#allocation13 + $0x78] sm:$0xff]
    %v614 = vld [vmem:[#allocation13 + $0x80] sm:$0xf]
    %v615 = vld [vmem:[#allocation13 + $0x84] sm:$0xff]
    %v616 = vld [vmem:[#allocation13 + $0x8c] sm:$0xf]
    %v617 = vld [vmem:[#allocation13 + $0x90] sm:$0xff]
    %v618 = vld [vmem:[#allocation13 + $0x98] sm:$0xf]
    %v619 = vld [vmem:[#allocation13 + $0x9c] sm:$0xff]
    %v620 = vld [vmem:[#allocation13 + $0xa4] sm:$0xf]
    %v621 = vld [vmem:[#allocation13 + $0xa8] sm:$0xff]
    %v622 = vld [vmem:[#allocation13 + $0xb0] sm:$0xf]
    %v623 = vld [vmem:[#allocation13 + $0xb4] sm:$0xff]
    %v624 = vld [vmem:[#allocation13 + $0xbc] sm:$0xf]
    %v625 = vld [vmem:[#allocation13 + $0xc0] sm:$0xff]
    %v626 = vld [vmem:[#allocation13 + $0xc8] sm:$0xf]
    %v627 = vld [vmem:[#allocation13 + $0xcc] sm:$0xff]
    %v628 = vld [vmem:[#allocation13 + $0xd4] sm:$0xf]
    %v629 = vld [vmem:[#allocation13 + $0xd8] sm:$0xff]
    %v630 = vld [vmem:[#allocation13 + $0xe0] sm:$0xf]
    %v631 = vld [vmem:[#allocation13 + $0xe4] sm:$0xff]
    %v632 = vld [vmem:[#allocation13 + $0xec] sm:$0xf]
    %v633 = vld [vmem:[#allocation13 + $0xf0] sm:$0xff]
    %v634 = vld [vmem:[#allocation13 + $0xf8] sm:$0xf]
    %v635 = vld [vmem:[#allocation13 + $0xfc] sm:$0xff]
    %v636 = vld [vmem:[#allocation13 + $0x104] sm:$0xf]
    %v637 = vld [vmem:[#allocation13 + $0x108] sm:$0xff]
    %v638 = vld [vmem:[#allocation13 + $0x110] sm:$0xf]
    %v639 = vld [vmem:[#allocation13 + $0x114] sm:$0xff]
    %v640 = vld [vmem:[#allocation13 + $0x11c] sm:$0xf]
    %v641 = vld [vmem:[#allocation13 + $0x120] sm:$0xff]
    %v642 = vld [vmem:[#allocation13 + $0x128] sm:$0xf]
    %v643 = vld [vmem:[#allocation13 + $0x12c] sm:$0xff]
    %v644 = vld [vmem:[#allocation13 + $0x134] sm:$0xf]
    %v645 = vld [vmem:[#allocation13 + $0x138] sm:$0xff]
    %v646 = vld [vmem:[#allocation13 + $0x140] sm:$0xf]
    %v647 = vld [vmem:[#allocation13 + $0x144] sm:$0xff]
    %v648 = vld [vmem:[#allocation13 + $0x14c] sm:$0xf]
    %v649 = vld [vmem:[#allocation13 + $0x150] sm:$0xff]
    %v650 = vld [vmem:[#allocation13 + $0x158] sm:$0xf]
    %v651 = vld [vmem:[#allocation13 + $0x15c] sm:$0xff]
    %v652 = vld [vmem:[#allocation13 + $0x164] sm:$0xf]
    %v653 = vld [vmem:[#allocation13 + $0x168] sm:$0xff]
    %v654 = vld [vmem:[#allocation13 + $0x170] sm:$0xf]
    %v655 = vld [vmem:[#allocation13 + $0x174] sm:$0xff]
    %v656 = vld [vmem:[#allocation13 + $0x17c] sm:$0xf]
    %v657 = vld [vmem:[#allocation13 + $0x180] sm:$0xff]
    %v658 = vld [vmem:[#allocation13 + $0x188] sm:$0xf]
    %v659 = vld [vmem:[#allocation13 + $0x18c] sm:$0xff]
    %v660 = vld [vmem:[#allocation13 + $0x194] sm:$0xf]
    %v661 = vld [vmem:[#allocation13 + $0x198] sm:$0xff]
    %v662 = vld [vmem:[#allocation13 + $0x1a0] sm:$0xf]
    %v663 = vld [vmem:[#allocation13 + $0x1a4] sm:$0xff]
    %v664 = vld [vmem:[#allocation13 + $0x1ac] sm:$0xf]
    %v665 = vld [vmem:[#allocation13 + $0x1b0] sm:$0xff]
    %v666 = vld [vmem:[#allocation13 + $0x1b8] sm:$0xf]
    %v667 = vld [vmem:[#allocation13 + $0x1bc] sm:$0xff]
    %v668 = vld [vmem:[#allocation13 + $0x1c4] sm:$0xf]
    %v669 = vld [vmem:[#allocation13 + $0x1c8] sm:$0xff]
    %v670 = vld [vmem:[#allocation13 + $0x1d0] sm:$0xf]
    %v671 = vld [vmem:[#allocation13 + $0x1d4] sm:$0xff]
    %v672 = vld [vmem:[#allocation13 + $0x1dc] sm:$0xf]
    %v673 = vld [vmem:[#allocation13 + $0x1e0] sm:$0xff]
    %v674 = vld [vmem:[#allocation13 + $0x1e8] sm:$0xf]
    %v675 = vld [vmem:[#allocation13 + $0x1ec] sm:$0xff]
    %v676 = vld [vmem:[#allocation13 + $0x1f4] sm:$0xf]
    %v677 = vld [vmem:[#allocation13 + $0x1f8] sm:$0xff]
    %v678 = vld [vmem:[#allocation13 + $0x200] sm:$0xf]
    %v679 = vld [vmem:[#allocation13 + $0x204] sm:$0xff]
    %v680 = vld [vmem:[#allocation13 + $0x20c] sm:$0xf]
    %v681 = vld [vmem:[#allocation13 + $0x210] sm:$0xff]
    %v682 = vld [vmem:[#allocation13 + $0x218] sm:$0xf]
    %v683 = vld [vmem:[#allocation13 + $0x21c] sm:$0xff]
    %v684 = vld [vmem:[#allocation13 + $0x224] sm:$0xf]
    %v685 = vld [vmem:[#allocation13 + $0x228] sm:$0xff]
    %v686 = vld [vmem:[#allocation13 + $0x230] sm:$0xf]
    %v687 = vld [vmem:[#allocation13 + $0x234] sm:$0xff]
    %v688 = vld [vmem:[#allocation13 + $0x23c] sm:$0xf]
    %v689 = vld [vmem:[#allocation13 + $0x240] sm:$0xff]
    %v690 = vld [vmem:[#allocation13 + $0x248] sm:$0xf]
    %v691 = vld [vmem:[#allocation13 + $0x24c] sm:$0xff]
    %v692 = vld [vmem:[#allocation13 + $0x254] sm:$0xf]
    %v693 = vld [vmem:[#allocation13 + $0x258] sm:$0xff]
    %v694 = vld [vmem:[#allocation13 + $0x260] sm:$0xf]
    %v695 = vld [vmem:[#allocation13 + $0x264] sm:$0xff]
    %v696 = vld [vmem:[#allocation13 + $0x26c] sm:$0xf]
    %v697 = vld [vmem:[#allocation13 + $0x270] sm:$0xff]
    %v698 = vld [vmem:[#allocation13 + $0x278] sm:$0xf]
    %v699 = vld [vmem:[#allocation13 + $0x27c] sm:$0xff]
    %v700 = vld [vmem:[#allocation13 + $0x284] sm:$0xf]
    %v701 = vld [vmem:[#allocation13 + $0x288] sm:$0xff]
    %v702 = vld [vmem:[#allocation13 + $0x290] sm:$0xf]
    %v703 = vld [vmem:[#allocation13 + $0x294] sm:$0xff]
    %v704 = vld [vmem:[#allocation13 + $0x29c] sm:$0xf]
    %v705 = vld [vmem:[#allocation13 + $0x2a0] sm:$0xff]
    %v706 = vld [vmem:[#allocation13 + $0x2a8] sm:$0xf]
    %v707 = vld [vmem:[#allocation13 + $0x2ac] sm:$0xff]
    %v708 = vld [vmem:[#allocation13 + $0x2b4] sm:$0xf]
    %v709 = vld [vmem:[#allocation13 + $0x2b8] sm:$0xff]
    %v710 = vld [vmem:[#allocation13 + $0x2c0] sm:$0xf]
    %v711 = vld [vmem:[#allocation13 + $0x2c4] sm:$0xff]
    %v712 = vld [vmem:[#allocation13 + $0x2cc] sm:$0xf]
    %v713 = vld [vmem:[#allocation13 + $0x2d0] sm:$0xff]
    %v714 = vld [vmem:[#allocation13 + $0x2d8] sm:$0xf]
    %v715 = vld [vmem:[#allocation13 + $0x2dc] sm:$0xff]
    %v716 = vld [vmem:[#allocation13 + $0x2e4] sm:$0xf]
    %v717 = vld [vmem:[#allocation13 + $0x2e8] sm:$0xff]
    %v718 = vld [vmem:[#allocation13 + $0x2f0] sm:$0xf]
    %v719 = vld [vmem:[#allocation13 + $0x2f4] sm:$0xff]
    %v720 = vld [vmem:[#allocation13 + $0x2fc] sm:$0xf]
    %v721 = vld [vmem:[#allocation14] sm:$0x7]
    %v723 = vlaneseq
    %v724 = vshrl.u32 %v723, 7
    %v725 = vsub.s32 0, %v724
    %v726 = vrot.slane %v721, %v725
    %v727 = vlaneseq
    %v728 = vshrl.u32 %v727, 7
    %v729 = vsub.s32 1, %v728
    %v730 = vrot.slane %v721, %v729
    %v731 = vlaneseq
    %v732 = vshrl.u32 %v731, 7
    %v733 = vsub.s32 2, %v732
    %v734 = vrot.slane %v721, %v733
    %v866 = vunpack.c.l.b16 %v593
    %v867 = vunpack.c.h.b16 %v593
    %v868 = vunpack.c.l.b16 %v594
    %v869 = vunpack.c.l.b16 %v595
    %v870 = vunpack.c.h.b16 %v595
    %v871 = vunpack.c.l.b16 %v596
    %v872 = vunpack.c.l.b16 %v597
    %v873 = vunpack.c.h.b16 %v597
    %v874 = vunpack.c.l.b16 %v598
    %v875 = vunpack.c.l.b16 %v599
    %v876 = vunpack.c.h.b16 %v599
    %v877 = vunpack.c.l.b16 %v600
    %v878 = vunpack.c.l.b16 %v601
    %v879 = vunpack.c.h.b16 %v601
    %v880 = vunpack.c.l.b16 %v602
    %v881 = vunpack.c.l.b16 %v603
    %v882 = vunpack.c.h.b16 %v603
    %v883 = vunpack.c.l.b16 %v604
    %v884 = vunpack.c.l.b16 %v605
    %v885 = vunpack.c.h.b16 %v605
    %v886 = vunpack.c.l.b16 %v606
    %v887 = vunpack.c.l.b16 %v607
    %v888 = vunpack.c.h.b16 %v607
    %v889 = vunpack.c.l.b16 %v608
    %v890 = vunpack.c.l.b16 %v609
    %v891 = vunpack.c.h.b16 %v609
    %v892 = vunpack.c.l.b16 %v610
    %v893 = vunpack.c.l.b16 %v611
    %v894 = vunpack.c.h.b16 %v611
    %v895 = vunpack.c.l.b16 %v612
    %v896 = vunpack.c.l.b16 %v613
    %v897 = vunpack.c.h.b16 %v613
    %v898 = vunpack.c.l.b16 %v614
    %v899 = vunpack.c.l.b16 %v615
    %v900 = vunpack.c.h.b16 %v615
    %v901 = vunpack.c.l.b16 %v616
    %v902 = vunpack.c.l.b16 %v617
    %v903 = vunpack.c.h.b16 %v617
    %v904 = vunpack.c.l.b16 %v618
    %v905 = vunpack.c.l.b16 %v619
    %v906 = vunpack.c.h.b16 %v619
    %v907 = vunpack.c.l.b16 %v620
    %v908 = vunpack.c.l.b16 %v621
    %v909 = vunpack.c.h.b16 %v621
    %v910 = vunpack.c.l.b16 %v622
    %v911 = vunpack.c.l.b16 %v623
    %v912 = vunpack.c.h.b16 %v623
    %v913 = vunpack.c.l.b16 %v624
    %v914 = vunpack.c.l.b16 %v625
    %v915 = vunpack.c.h.b16 %v625
    %v916 = vunpack.c.l.b16 %v626
    %v917 = vunpack.c.l.b16 %v627
    %v918 = vunpack.c.h.b16 %v627
    %v919 = vunpack.c.l.b16 %v628
    %v920 = vunpack.c.l.b16 %v629
    %v921 = vunpack.c.h.b16 %v629
    %v922 = vunpack.c.l.b16 %v630
    %v923 = vunpack.c.l.b16 %v631
    %v924 = vunpack.c.h.b16 %v631
    %v925 = vunpack.c.l.b16 %v632
    %v926 = vunpack.c.l.b16 %v633
    %v927 = vunpack.c.h.b16 %v633
    %v928 = vunpack.c.l.b16 %v634
    %v929 = vunpack.c.l.b16 %v635
    %v930 = vunpack.c.h.b16 %v635
    %v931 = vunpack.c.l.b16 %v636
    %v932 = vunpack.c.l.b16 %v637
    %v933 = vunpack.c.h.b16 %v637
    %v934 = vunpack.c.l.b16 %v638
    %v935 = vunpack.c.l.b16 %v639
    %v936 = vunpack.c.h.b16 %v639
    %v937 = vunpack.c.l.b16 %v640
    %v938 = vunpack.c.l.b16 %v641
    %v939 = vunpack.c.h.b16 %v641
    %v940 = vunpack.c.l.b16 %v642
    %v941 = vunpack.c.l.b16 %v643
    %v942 = vunpack.c.h.b16 %v643
    %v943 = vunpack.c.l.b16 %v644
    %v944 = vunpack.c.l.b16 %v645
    %v945 = vunpack.c.h.b16 %v645
    %v946 = vunpack.c.l.b16 %v646
    %v947 = vunpack.c.l.b16 %v647
    %v948 = vunpack.c.h.b16 %v647
    %v949 = vunpack.c.l.b16 %v648
    %v950 = vunpack.c.l.b16 %v649
    %v951 = vunpack.c.h.b16 %v649
    %v952 = vunpack.c.l.b16 %v650
    %v953 = vunpack.c.l.b16 %v651
    %v954 = vunpack.c.h.b16 %v651
    %v955 = vunpack.c.l.b16 %v652
    %v956 = vunpack.c.l.b16 %v653
    %v957 = vunpack.c.h.b16 %v653
    %v958 = vunpack.c.l.b16 %v654
    %v959 = vunpack.c.l.b16 %v655
    %v960 = vunpack.c.h.b16 %v655
    %v961 = vunpack.c.l.b16 %v656
    %v962 = vunpack.c.l.b16 %v657
    %v963 = vunpack.c.h.b16 %v657
    %v964 = vunpack.c.l.b16 %v658
    %v965 = vunpack.c.l.b16 %v659
    %v966 = vunpack.c.h.b16 %v659
    %v967 = vunpack.c.l.b16 %v660
    %v968 = vunpack.c.l.b16 %v661
    %v969 = vunpack.c.h.b16 %v661
    %v970 = vunpack.c.l.b16 %v662
    %v971 = vunpack.c.l.b16 %v663
    %v972 = vunpack.c.h.b16 %v663
    %v973 = vunpack.c.l.b16 %v664
    %v974 = vunpack.c.l.b16 %v665
    %v975 = vunpack.c.h.b16 %v665
    %v976 = vunpack.c.l.b16 %v666
    %v977 = vunpack.c.l.b16 %v667
    %v978 = vunpack.c.h.b16 %v667
    %v979 = vunpack.c.l.b16 %v668
    %v980 = vunpack.c.l.b16 %v669
    %v981 = vunpack.c.h.b16 %v669
    %v982 = vunpack.c.l.b16 %v670
    %v983 = vunpack.c.l.b16 %v671
    %v984 = vunpack.c.h.b16 %v671
    %v985 = vunpack.c.l.b16 %v672
    %v986 = vunpack.c.l.b16 %v673
    %v987 = vunpack.c.h.b16 %v673
    %v988 = vunpack.c.l.b16 %v674
    %v989 = vunpack.c.l.b16 %v675
    %v990 = vunpack.c.h.b16 %v675
    %v991 = vunpack.c.l.b16 %v676
    %v992 = vunpack.c.l.b16 %v677
    %v993 = vunpack.c.h.b16 %v677
    %v994 = vunpack.c.l.b16 %v678
    %v995 = vunpack.c.l.b16 %v679
    %v996 = vunpack.c.h.b16 %v679
    %v997 = vunpack.c.l.b16 %v680
    %v998 = vunpack.c.l.b16 %v681
    %v999 = vunpack.c.h.b16 %v681
    %v1000 = vunpack.c.l.b16 %v682
    %v1001 = vunpack.c.l.b16 %v683
    %v1002 = vunpack.c.h.b16 %v683
    %v1003 = vunpack.c.l.b16 %v684
    %v1004 = vunpack.c.l.b16 %v685
    %v1005 = vunpack.c.h.b16 %v685
    %v1006 = vunpack.c.l.b16 %v686
    %v1007 = vunpack.c.l.b16 %v687
    %v1008 = vunpack.c.h.b16 %v687
    %v1009 = vunpack.c.l.b16 %v688
    %v1010 = vunpack.c.l.b16 %v689
    %v1011 = vunpack.c.h.b16 %v689
    %v1012 = vunpack.c.l.b16 %v690
    %v1013 = vunpack.c.l.b16 %v691
    %v1014 = vunpack.c.h.b16 %v691
    %v1015 = vunpack.c.l.b16 %v692
    %v1016 = vunpack.c.l.b16 %v693
    %v1017 = vunpack.c.h.b16 %v693
    %v1018 = vunpack.c.l.b16 %v694
    %v1019 = vunpack.c.l.b16 %v695
    %v1020 = vunpack.c.h.b16 %v695
    %v1021 = vunpack.c.l.b16 %v696
    %v1022 = vunpack.c.l.b16 %v697
    %v1023 = vunpack.c.h.b16 %v697
    %v1024 = vunpack.c.l.b16 %v698
    %v1025 = vunpack.c.l.b16 %v699
    %v1026 = vunpack.c.h.b16 %v699
    %v1027 = vunpack.c.l.b16 %v700
    %v1028 = vunpack.c.l.b16 %v701
    %v1029 = vunpack.c.h.b16 %v701
    %v1030 = vunpack.c.l.b16 %v702
    %v1031 = vunpack.c.l.b16 %v703
    %v1032 = vunpack.c.h.b16 %v703
    %v1033 = vunpack.c.l.b16 %v704
    %v1034 = vunpack.c.l.b16 %v705
    %v1035 = vunpack.c.h.b16 %v705
    %v1036 = vunpack.c.l.b16 %v706
    %v1037 = vunpack.c.l.b16 %v707
    %v1038 = vunpack.c.h.b16 %v707
    %v1039 = vunpack.c.l.b16 %v708
    %v1040 = vunpack.c.l.b16 %v709
    %v1041 = vunpack.c.h.b16 %v709
    %v1042 = vunpack.c.l.b16 %v710
    %v1043 = vunpack.c.l.b16 %v711
    %v1044 = vunpack.c.h.b16 %v711
    %v1045 = vunpack.c.l.b16 %v712
    %v1046 = vunpack.c.l.b16 %v713
    %v1047 = vunpack.c.h.b16 %v713
    %v1048 = vunpack.c.l.b16 %v714
    %v1049 = vunpack.c.l.b16 %v715
    %v1050 = vunpack.c.h.b16 %v715
    %v1051 = vunpack.c.l.b16 %v716
    %v1052 = vunpack.c.l.b16 %v717
    %v1053 = vunpack.c.h.b16 %v717
    %v1054 = vunpack.c.l.b16 %v718
    %v1055 = vunpack.c.l.b16 %v719
    %v1056 = vunpack.c.h.b16 %v719
    %v1057 = vunpack.c.l.b16 %v720
    %v1058 = vpack.c.b16 %v869, %v866
    %v1059 = vpack.c.b16 %v870, %v867
    %v1060 = vpack.c.b16 %v871, %v868
    %v1061 = vpack.c.b16 %v875, %v872
    %v1062 = vpack.c.b16 %v876, %v873
    %v1063 = vpack.c.b16 %v877, %v874
    %v1064 = vpack.c.b16 %v881, %v878
    %v1065 = vpack.c.b16 %v882, %v879
    %v1066 = vpack.c.b16 %v883, %v880
    %v1067 = vpack.c.b16 %v887, %v884
    %v1068 = vpack.c.b16 %v888, %v885
    %v1069 = vpack.c.b16 %v889, %v886
    %v1070 = vpack.c.b16 %v893, %v890
    %v1071 = vpack.c.b16 %v894, %v891
    %v1072 = vpack.c.b16 %v895, %v892
    %v1073 = vpack.c.b16 %v899, %v896
    %v1074 = vpack.c.b16 %v900, %v897
    %v1075 = vpack.c.b16 %v901, %v898
    %v1076 = vpack.c.b16 %v905, %v902
    %v1077 = vpack.c.b16 %v906, %v903
    %v1078 = vpack.c.b16 %v907, %v904
    %v1079 = vpack.c.b16 %v911, %v908
    %v1080 = vpack.c.b16 %v912, %v909
    %v1081 = vpack.c.b16 %v913, %v910
    %v1082 = vpack.c.b16 %v917, %v914
    %v1083 = vpack.c.b16 %v918, %v915
    %v1084 = vpack.c.b16 %v919, %v916
    %v1085 = vpack.c.b16 %v923, %v920
    %v1086 = vpack.c.b16 %v924, %v921
    %v1087 = vpack.c.b16 %v925, %v922
    %v1088 = vpack.c.b16 %v929, %v926
    %v1089 = vpack.c.b16 %v930, %v927
    %v1090 = vpack.c.b16 %v931, %v928
    %v1091 = vpack.c.b16 %v935, %v932
    %v1092 = vpack.c.b16 %v936, %v933
    %v1093 = vpack.c.b16 %v937, %v934
    %v1094 = vpack.c.b16 %v941, %v938
    %v1095 = vpack.c.b16 %v942, %v939
    %v1096 = vpack.c.b16 %v943, %v940
    %v1097 = vpack.c.b16 %v947, %v944
    %v1098 = vpack.c.b16 %v948, %v945
    %v1099 = vpack.c.b16 %v949, %v946
    %v1100 = vpack.c.b16 %v953, %v950
    %v1101 = vpack.c.b16 %v954, %v951
    %v1102 = vpack.c.b16 %v955, %v952
    %v1103 = vpack.c.b16 %v959, %v956
    %v1104 = vpack.c.b16 %v960, %v957
    %v1105 = vpack.c.b16 %v961, %v958
    %v1106 = vpack.c.b16 %v965, %v962
    %v1107 = vpack.c.b16 %v966, %v963
    %v1108 = vpack.c.b16 %v967, %v964
    %v1109 = vpack.c.b16 %v971, %v968
    %v1110 = vpack.c.b16 %v972, %v969
    %v1111 = vpack.c.b16 %v973, %v970
    %v1112 = vpack.c.b16 %v977, %v974
    %v1113 = vpack.c.b16 %v978, %v975
    %v1114 = vpack.c.b16 %v979, %v976
    %v1115 = vpack.c.b16 %v983, %v980
    %v1116 = vpack.c.b16 %v984, %v981
    %v1117 = vpack.c.b16 %v985, %v982
    %v1118 = vpack.c.b16 %v989, %v986
    %v1119 = vpack.c.b16 %v990, %v987
    %v1120 = vpack.c.b16 %v991, %v988
    %v1121 = vpack.c.b16 %v995, %v992
    %v1122 = vpack.c.b16 %v996, %v993
    %v1123 = vpack.c.b16 %v997, %v994
    %v1124 = vpack.c.b16 %v1001, %v998
    %v1125 = vpack.c.b16 %v1002, %v999
    %v1126 = vpack.c.b16 %v1003, %v1000
    %v1127 = vpack.c.b16 %v1007, %v1004
    %v1128 = vpack.c.b16 %v1008, %v1005
    %v1129 = vpack.c.b16 %v1009, %v1006
    %v1130 = vpack.c.b16 %v1013, %v1010
    %v1131 = vpack.c.b16 %v1014, %v1011
    %v1132 = vpack.c.b16 %v1015, %v1012
    %v1133 = vpack.c.b16 %v1019, %v1016
    %v1134 = vpack.c.b16 %v1020, %v1017
    %v1135 = vpack.c.b16 %v1021, %v1018
    %v1136 = vpack.c.b16 %v1025, %v1022
    %v1137 = vpack.c.b16 %v1026, %v1023
    %v1138 = vpack.c.b16 %v1027, %v1024
    %v1139 = vpack.c.b16 %v1031, %v1028
    %v1140 = vpack.c.b16 %v1032, %v1029
    %v1141 = vpack.c.b16 %v1033, %v1030
    %v1142 = vpack.c.b16 %v1037, %v1034
    %v1143 = vpack.c.b16 %v1038, %v1035
    %v1144 = vpack.c.b16 %v1039, %v1036
    %v1145 = vpack.c.b16 %v1043, %v1040
    %v1146 = vpack.c.b16 %v1044, %v1041
    %v1147 = vpack.c.b16 %v1045, %v1042
    %v1148 = vpack.c.b16 %v1049, %v1046
    %v1149 = vpack.c.b16 %v1050, %v1047
    %v1150 = vpack.c.b16 %v1051, %v1048
    %v1151 = vpack.c.b16 %v1055, %v1052
    %v1152 = vpack.c.b16 %v1056, %v1053
    %v1153 = vpack.c.b16 %v1057, %v1054
    %1250 = vmatprep.subr.bf16.mxu0 %v1080
    %1251 = vmatpush1.bf16.msra.mxu0 %v1079
    %1252 = vmatprep.subr.bf16.mxu0 %v1077
    %1253 = vmatpush1.bf16.msra.mxu0 %v1076
    %1254 = vmatprep.subr.bf16.mxu0 %v1074
    %1255 = vmatpush1.bf16.msra.mxu0 %v1073
    %1256 = vmatprep.subr.bf16.mxu0 %v1071
    %1257 = vmatpush1.bf16.msra.mxu0 %v1070
    %1258 = vmatprep.subr.bf16.mxu0 %v1068
    %1259 = vmatpush1.bf16.msra.mxu0 %v1067
    %1260 = vmatprep.subr.bf16.mxu0 %v1065
    %1261 = vmatpush1.bf16.msra.mxu0 %v1064
    %1262 = vmatprep.subr.bf16.mxu0 %v1062
    %1263 = vmatpush1.bf16.msra.mxu0 %v1061
    %1264 = vmatprep.subr.bf16.mxu0 %v1059
    %1265 = vmatpush1.bf16.msra.mxu0 %v1058
    %1266 = vmatprep.subr.bf16.mxu0 %v1104
    %1267 = vmatpush2.bf16.msra.mxu0 %v1103
    %1268 = vmatprep.subr.bf16.mxu0 %v1101
    %1269 = vmatpush2.bf16.msra.mxu0 %v1100
    %1270 = vmatprep.subr.bf16.mxu0 %v1098
    %1271 = vmatpush2.bf16.msra.mxu0 %v1097
    %1272 = vmatprep.subr.bf16.mxu0 %v1095
    %1273 = vmatpush2.bf16.msra.mxu0 %v1094
    %1274 = vmatprep.subr.bf16.mxu0 %v1092
    %1275 = vmatpush2.bf16.msra.mxu0 %v1091
    %1276 = vmatprep.subr.bf16.mxu0 %v1089
    %1277 = vmatpush2.bf16.msra.mxu0 %v1088
    %1278 = vmatprep.subr.bf16.mxu0 %v1086
    %1279 = vmatpush2.bf16.msra.mxu0 %v1085
    %1280 = vmatprep.subr.bf16.mxu0 %v1083
    %1281 = vmatpush2.bf16.msra.mxu0 %v1082
    %1282 = vmatprep.mubr.bf16.mxu0 %v590
    %1283 = vmatmul.mubr.bf16.gmra.mxu0 %v589
    %v1284 = vpop.f32.mrf.mxu0
    %v1285 = vadd.f32 %v726, %v1284
    %v1286 = vpop.f32.mrf.mxu0
    %v1287 = vadd.f32 %v730, %v1286
    %v1288 = vpop.f32.mrf.mxu0
    %v1289 = vpop.f32.mrf.mxu0
    %1290 = vdwg.mxu0
    %1291 = vmatprep.subr.bf16.mxu0 %v1128
    %1292 = vmatpush1.bf16.msra.mxu0 %v1127
    %1293 = vmatprep.subr.bf16.mxu0 %v1125
    %1294 = vmatpush1.bf16.msra.mxu0 %v1124
    %1295 = vmatprep.subr.bf16.mxu0 %v1122
    %1296 = vmatpush1.bf16.msra.mxu0 %v1121
    %1297 = vmatprep.subr.bf16.mxu0 %v1119
    %1298 = vmatpush1.bf16.msra.mxu0 %v1118
    %1299 = vmatprep.subr.bf16.mxu0 %v1116
    %1300 = vmatpush1.bf16.msra.mxu0 %v1115
    %1301 = vmatprep.subr.bf16.mxu0 %v1113
    %1302 = vmatpush1.bf16.msra.mxu0 %v1112
    %1303 = vmatprep.subr.bf16.mxu0 %v1110
    %1304 = vmatpush1.bf16.msra.mxu0 %v1109
    %1305 = vmatprep.subr.bf16.mxu0 %v1107
    %1306 = vmatpush1.bf16.msra.mxu0 %v1106
    %1307 = vmatprep.subr.bf16.mxu0 %v1152
    %1308 = vmatpush2.bf16.msra.mxu0 %v1151
    %1309 = vmatprep.subr.bf16.mxu0 %v1149
    %1310 = vmatpush2.bf16.msra.mxu0 %v1148
    %1311 = vmatprep.subr.bf16.mxu0 %v1146
    %1312 = vmatpush2.bf16.msra.mxu0 %v1145
    %1313 = vmatprep.subr.bf16.mxu0 %v1143
    %1314 = vmatpush2.bf16.msra.mxu0 %v1142
    %1315 = vmatprep.subr.bf16.mxu0 %v1140
    %1316 = vmatpush2.bf16.msra.mxu0 %v1139
    %1317 = vmatprep.subr.bf16.mxu0 %v1137
    %1318 = vmatpush2.bf16.msra.mxu0 %v1136
    %1319 = vmatprep.subr.bf16.mxu0 %v1134
    %1320 = vmatpush2.bf16.msra.mxu0 %v1133
    %1321 = vmatprep.subr.bf16.mxu0 %v1131
    %1322 = vmatpush2.bf16.msra.mxu0 %v1130
    %1323 = vmatprep.mubr.bf16.mxu0 %v592
    %1324 = vmatmul.mubr.bf16.gmra.mxu0 %v591
    %v1325 = vpop.f32.mrf.mxu0
    %v1326 = vadd.f32 %v1285, %v1325
    %v1327 = vpop.f32.mrf.mxu0
    %v1328 = vadd.f32 %v1287, %v1327
    %v1329 = vpop.f32.mrf.mxu0
    %v1330 = vpop.f32.mrf.mxu0
    %1331 = vdwg.mxu0
    %1332 = vmatprep.subr.bf16.mxu0 0
    %1333 = vmatpush1.bf16.msra.mxu0 %v1081
    %1334 = vmatprep.subr.bf16.mxu0 0
    %1335 = vmatpush1.bf16.msra.mxu0 %v1078
    %1336 = vmatprep.subr.bf16.mxu0 0
    %1337 = vmatpush1.bf16.msra.mxu0 %v1075
    %1338 = vmatprep.subr.bf16.mxu0 0
    %1339 = vmatpush1.bf16.msra.mxu0 %v1072
    %1340 = vmatprep.subr.bf16.mxu0 0
    %1341 = vmatpush1.bf16.msra.mxu0 %v1069
    %1342 = vmatprep.subr.bf16.mxu0 0
    %1343 = vmatpush1.bf16.msra.mxu0 %v1066
    %1344 = vmatprep.subr.bf16.mxu0 0
    %1345 = vmatpush1.bf16.msra.mxu0 %v1063
    %1346 = vmatprep.subr.bf16.mxu0 0
    %1347 = vmatpush1.bf16.msra.mxu0 %v1060
    %1348 = vmatprep.subr.bf16.mxu0 0
    %1349 = vmatpush2.bf16.msra.mxu0 %v1105
    %1350 = vmatprep.subr.bf16.mxu0 0
    %1351 = vmatpush2.bf16.msra.mxu0 %v1102
    %1352 = vmatprep.subr.bf16.mxu0 0
    %1353 = vmatpush2.bf16.msra.mxu0 %v1099
    %1354 = vmatprep.subr.bf16.mxu0 0
    %1355 = vmatpush2.bf16.msra.mxu0 %v1096
    %1356 = vmatprep.subr.bf16.mxu0 0
    %1357 = vmatpush2.bf16.msra.mxu0 %v1093
    %1358 = vmatprep.subr.bf16.mxu0 0
    %1359 = vmatpush2.bf16.msra.mxu0 %v1090
    %1360 = vmatprep.subr.bf16.mxu0 0
    %1361 = vmatpush2.bf16.msra.mxu0 %v1087
    %1362 = vmatprep.subr.bf16.mxu0 0
    %1363 = vmatpush2.bf16.msra.mxu0 %v1084
    %1364 = vmatprep.mubr.bf16.mxu0 %v590
    %1365 = vmatmul.mubr.bf16.gmra.mxu0 %v589
    %v1366 = vpop.f32.mrf.mxu0
    %v1367 = vadd.f32 %v734, %v1366
    %v1368 = vpop.f32.mrf.mxu0
    %v1369 = vpop.f32.mrf.mxu0
    %v1370 = vpop.f32.mrf.mxu0
    %1371 = vdwg.mxu0
    %1372 = vmatprep.subr.bf16.mxu0 0
    %1373 = vmatpush1.bf16.msra.mxu0 %v1129
    %1374 = vmatprep.subr.bf16.mxu0 0
    %1375 = vmatpush1.bf16.msra.mxu0 %v1126
    %1376 = vmatprep.subr.bf16.mxu0 0
    %1377 = vmatpush1.bf16.msra.mxu0 %v1123
    %1378 = vmatprep.subr.bf16.mxu0 0
    %1379 = vmatpush1.bf16.msra.mxu0 %v1120
    %1380 = vmatprep.subr.bf16.mxu0 0
    %1381 = vmatpush1.bf16.msra.mxu0 %v1117
    %1382 = vmatprep.subr.bf16.mxu0 0
    %1383 = vmatpush1.bf16.msra.mxu0 %v1114
    %1384 = vmatprep.subr.bf16.mxu0 0
    %1385 = vmatpush1.bf16.msra.mxu0 %v1111
    %1386 = vmatprep.subr.bf16.mxu0 0
    %1387 = vmatpush1.bf16.msra.mxu0 %v1108
    %1388 = vmatprep.subr.bf16.mxu0 0
    %1389 = vmatpush2.bf16.msra.mxu0 %v1153
    %1390 = vmatprep.subr.bf16.mxu0 0
    %1391 = vmatpush2.bf16.msra.mxu0 %v1150
    %1392 = vmatprep.subr.bf16.mxu0 0
    %1393 = vmatpush2.bf16.msra.mxu0 %v1147
    %1394 = vmatprep.subr.bf16.mxu0 0
    %1395 = vmatpush2.bf16.msra.mxu0 %v1144
    %1396 = vmatprep.subr.bf16.mxu0 0
    %1397 = vmatpush2.bf16.msra.mxu0 %v1141
    %1398 = vmatprep.subr.bf16.mxu0 0
    %1399 = vmatpush2.bf16.msra.mxu0 %v1138
    %1400 = vmatprep.subr.bf16.mxu0 0
    %1401 = vmatpush2.bf16.msra.mxu0 %v1135
    %1402 = vmatprep.subr.bf16.mxu0 0
    %1403 = vmatpush2.bf16.msra.mxu0 %v1132
    %1404 = vmatprep.mubr.bf16.mxu0 %v592
    %1405 = vmatmul.mubr.bf16.gmra.mxu0 %v591
    %v1406 = vpop.f32.mrf.mxu0
    %v1407 = vadd.f32 %v1367, %v1406
    %v1408 = vpop.f32.mrf.mxu0
    %v1409 = vpop.f32.mrf.mxu0
    %v1410 = vpop.f32.mrf.mxu0
    %1411 = vdwg.mxu0
    %vm1412 = vcmp.lt.s32.totalorder %v487, 300
    %vm1413 = vcmp.lt.s32.totalorder %v488, 300
    %vm1414 = vcmp.lt.s32.totalorder %v489, 300
    %v1415 = vadd.f32 %v1326, %v1328
    %v1416 = vadd.f32 %v1415, %v1407
    %1417 = vadd.xlane.f32.xlu0 %v1416
    %v1418 = vpop.xlane.xlu0 %1417
    %v1419 = vmul.f32 %v1418, 0.0033333334
    %v1420 = vsub.f32 %v1326, %v1419
    %v1421 = vsub.f32 %v1328, %v1419
    %v1422 = vsub.f32 %v1407, %v1419
    %v1423 = vsel %vm1412, 1, 0
    %v1424 = vsel %vm1413, 1, 0
    %v1425 = vsel %vm1414, 1, 0
    %vm1426 = vcmp.eq.s32.totalorder %v1423, 1
    %vm1427 = vcmp.eq.s32.totalorder %v1424, 1
    %vm1428 = vcmp.eq.s32.totalorder %v1425, 1
    %v1429 = vsel %vm1426, %v1420, 0.0
    %v1430 = vsel %vm1427, %v1421, 0.0
    %v1431 = vsel %vm1428, %v1422, 0.0
    %v1432 = vmul.f32 %v1429, %v1429
    %v1433 = vmul.f32 %v1430, %v1430
    %v1434 = vmul.f32 %v1431, %v1431
    %v1435 = vadd.f32 %v1432, %v1433
    %v1436 = vadd.f32 %v1435, %v1434
    %1437 = vadd.xlane.f32.xlu0 %v1436
    %v1438 = vpop.xlane.xlu0 %1437
    %v1439 = vmul.f32 %v1438, 0.0033333334
    %v1440 = vadd.f32 %v1439, 1e-05
    %v1441 = vrsqrt.pop %v1440
    %v1442 = vmul.f32 %v1429, %v1441
    %v1443 = vmul.f32 %v1430, %v1441
    %v1444 = vmul.f32 %v1431, %v1441
    %v1445 = vld [vmem:[#allocation16] sm:$0x7]
    %v1447 = vlaneseq
    %v1448 = vshrl.u32 %v1447, 7
    %v1449 = vsub.s32 0, %v1448
    %v1450 = vrot.slane %v1445, %v1449
    %v1451 = vlaneseq
    %v1452 = vshrl.u32 %v1451, 7
    %v1453 = vsub.s32 1, %v1452
    %v1454 = vrot.slane %v1445, %v1453
    %v1455 = vlaneseq
    %v1456 = vshrl.u32 %v1455, 7
    %v1457 = vsub.s32 2, %v1456
    %v1458 = vrot.slane %v1445, %v1457
    %v1462 = vmul.f32 %v1442, %v1450
    %v1463 = vmul.f32 %v1443, %v1454
    %v1464 = vmul.f32 %v1444, %v1458
    %v1465 = vld [vmem:[#allocation17] sm:$0x7]
    %v1467 = vlaneseq
    %v1468 = vshrl.u32 %v1467, 7
    %v1469 = vsub.s32 0, %v1468
    %v1470 = vrot.slane %v1465, %v1469
    %v1471 = vlaneseq
    %v1472 = vshrl.u32 %v1471, 7
    %v1473 = vsub.s32 1, %v1472
    %v1474 = vrot.slane %v1465, %v1473
    %v1475 = vlaneseq
    %v1476 = vshrl.u32 %v1475, 7
    %v1477 = vsub.s32 2, %v1476
    %v1478 = vrot.slane %v1465, %v1477
    %v1482 = vadd.f32 %v1462, %v1470
    %v1483 = vadd.f32 %v1463, %v1474
    %v1484 = vadd.f32 %v1464, %v1478
    %v1485 = vmax.f32 %v1482, 0.0
    %v1486 = vmax.f32 %v1483, 0.0
    %v1487 = vmax.f32 %v1484, 0.0
    %v1488 = vpack.c.bf16 %v1485, %v1485
    %v1489 = vpack.c.bf16 %v1486, %v1486
    %v1490 = vpack.c.bf16 %v1487, %v1487
    %v1491 = vld [vmem:[#allocation19] sm:$0xf]
    %v1492 = vld [vmem:[#allocation19 + $0x4] sm:$0xf]
    %v1493 = vld [vmem:[#allocation19 + $0x8] sm:$0xf]
    %v1494 = vld [vmem:[#allocation19 + $0xc] sm:$0xf]
    %v1495 = vld [vmem:[#allocation19 + $0x10] sm:$0xf]
    %v1496 = vld [vmem:[#allocation19 + $0x14] sm:$0xf]
    %v1497 = vld [vmem:[#allocation19 + $0x18] sm:$0xf]
    %v1498 = vld [vmem:[#allocation19 + $0x1c] sm:$0xf]
    %v1499 = vld [vmem:[#allocation19 + $0x20] sm:$0xf]
    %v1500 = vld [vmem:[#allocation19 + $0x24] sm:$0xf]
    %v1501 = vld [vmem:[#allocation19 + $0x28] sm:$0xf]
    %v1502 = vld [vmem:[#allocation19 + $0x2c] sm:$0xf]
    %v1503 = vld [vmem:[#allocation19 + $0x30] sm:$0xf]
    %v1504 = vld [vmem:[#allocation19 + $0x34] sm:$0xf]
    %v1505 = vld [vmem:[#allocation19 + $0x38] sm:$0xf]
    %v1506 = vld [vmem:[#allocation19 + $0x3c] sm:$0xf]
    %v1507 = vld [vmem:[#allocation19 + $0x40] sm:$0xf]
    %v1508 = vld [vmem:[#allocation19 + $0x44] sm:$0xf]
    %v1509 = vld [vmem:[#allocation19 + $0x48] sm:$0xf]
    %v1510 = vld [vmem:[#allocation19 + $0x4c] sm:$0xf]
    %v1511 = vld [vmem:[#allocation19 + $0x50] sm:$0xf]
    %v1512 = vld [vmem:[#allocation19 + $0x54] sm:$0xf]
    %v1513 = vld [vmem:[#allocation19 + $0x58] sm:$0xf]
    %v1514 = vld [vmem:[#allocation19 + $0x5c] sm:$0xf]
    %v1515 = vld [vmem:[#allocation19 + $0x60] sm:$0xf]
    %v1516 = vld [vmem:[#allocation19 + $0x64] sm:$0xf]
    %v1517 = vld [vmem:[#allocation19 + $0x68] sm:$0xf]
    %v1518 = vld [vmem:[#allocation19 + $0x6c] sm:$0xf]
    %v1519 = vld [vmem:[#allocation19 + $0x70] sm:$0xf]
    %v1520 = vld [vmem:[#allocation19 + $0x74] sm:$0xf]
    %v1521 = vld [vmem:[#allocation19 + $0x78] sm:$0xf]
    %v1522 = vld [vmem:[#allocation19 + $0x7c] sm:$0xf]
    %v1523 = vld [vmem:[#allocation19 + $0x80] sm:$0xf]
    %v1524 = vld [vmem:[#allocation19 + $0x84] sm:$0xf]
    %v1525 = vld [vmem:[#allocation19 + $0x88] sm:$0xf]
    %v1526 = vld [vmem:[#allocation19 + $0x8c] sm:$0xf]
    %v1527 = vld [vmem:[#allocation19 + $0x90] sm:$0xf]
    %v1528 = vld [vmem:[#allocation19 + $0x94] sm:$0xf]
    %v1529 = vld [vmem:[#allocation19 + $0x98] sm:$0xf]
    %v1530 = vld [vmem:[#allocation19 + $0x9c] sm:$0xf]
    %v1531 = vld [vmem:[#allocation19 + $0xa0] sm:$0xf]
    %v1532 = vld [vmem:[#allocation19 + $0xa4] sm:$0xf]
    %v1533 = vld [vmem:[#allocation19 + $0xa8] sm:$0xf]
    %v1534 = vld [vmem:[#allocation19 + $0xac] sm:$0xf]
    %v1535 = vld [vmem:[#allocation19 + $0xb0] sm:$0xf]
    %v1536 = vld [vmem:[#allocation19 + $0xb4] sm:$0xf]
    %v1537 = vld [vmem:[#allocation19 + $0xb8] sm:$0xf]
    %v1538 = vld [vmem:[#allocation19 + $0xbc] sm:$0xf]
    %v1539 = vld [vmem:[#allocation20] sm:$0x1]
    %v1541 = vlaneseq
    %v1542 = vshrl.u32 %v1541, 7
    %v1543 = vsub.s32 0, %v1542
    %v1544 = vrot.slane %v1539, %v1543
    %v1594 = vunpack.c.l.b16 %v1491
    %v1595 = vunpack.c.l.b16 %v1492
    %v1596 = vunpack.c.l.b16 %v1493
    %v1597 = vunpack.c.l.b16 %v1494
    %v1598 = vunpack.c.l.b16 %v1495
    %v1599 = vunpack.c.l.b16 %v1496
    %v1600 = vunpack.c.l.b16 %v1497
    %v1601 = vunpack.c.l.b16 %v1498
    %v1602 = vunpack.c.l.b16 %v1499
    %v1603 = vunpack.c.l.b16 %v1500
    %v1604 = vunpack.c.l.b16 %v1501
    %v1605 = vunpack.c.l.b16 %v1502
    %v1606 = vunpack.c.l.b16 %v1503
    %v1607 = vunpack.c.l.b16 %v1504
    %v1608 = vunpack.c.l.b16 %v1505
    %v1609 = vunpack.c.l.b16 %v1506
    %v1610 = vunpack.c.l.b16 %v1507
    %v1611 = vunpack.c.l.b16 %v1508
    %v1612 = vunpack.c.l.b16 %v1509
    %v1613 = vunpack.c.l.b16 %v1510
    %v1614 = vunpack.c.l.b16 %v1511
    %v1615 = vunpack.c.l.b16 %v1512
    %v1616 = vunpack.c.l.b16 %v1513
    %v1617 = vunpack.c.l.b16 %v1514
    %v1618 = vunpack.c.l.b16 %v1515
    %v1619 = vunpack.c.l.b16 %v1516
    %v1620 = vunpack.c.l.b16 %v1517
    %v1621 = vunpack.c.l.b16 %v1518
    %v1622 = vunpack.c.l.b16 %v1519
    %v1623 = vunpack.c.l.b16 %v1520
    %v1624 = vunpack.c.l.b16 %v1521
    %v1625 = vunpack.c.l.b16 %v1522
    %v1626 = vunpack.c.l.b16 %v1523
    %v1627 = vunpack.c.l.b16 %v1524
    %v1628 = vunpack.c.l.b16 %v1525
    %v1629 = vunpack.c.l.b16 %v1526
    %v1630 = vunpack.c.l.b16 %v1527
    %v1631 = vunpack.c.l.b16 %v1528
    %v1632 = vunpack.c.l.b16 %v1529
    %v1633 = vunpack.c.l.b16 %v1530
    %v1634 = vunpack.c.l.b16 %v1531
    %v1635 = vunpack.c.l.b16 %v1532
    %v1636 = vunpack.c.l.b16 %v1533
    %v1637 = vunpack.c.l.b16 %v1534
    %v1638 = vunpack.c.l.b16 %v1535
    %v1639 = vunpack.c.l.b16 %v1536
    %v1640 = vunpack.c.l.b16 %v1537
    %v1641 = vunpack.c.l.b16 %v1538
    %v1642 = vpack.c.b16 %v1595, %v1594
    %v1643 = vpack.c.b16 %v1597, %v1596
    %v1644 = vpack.c.b16 %v1599, %v1598
    %v1645 = vpack.c.b16 %v1601, %v1600
    %v1646 = vpack.c.b16 %v1603, %v1602
    %v1647 = vpack.c.b16 %v1605, %v1604
    %v1648 = vpack.c.b16 %v1607, %v1606
    %v1649 = vpack.c.b16 %v1609, %v1608
    %v1650 = vpack.c.b16 %v1611, %v1610
    %v1651 = vpack.c.b16 %v1613, %v1612
    %v1652 = vpack.c.b16 %v1615, %v1614
    %v1653 = vpack.c.b16 %v1617, %v1616
    %v1654 = vpack.c.b16 %v1619, %v1618
    %v1655 = vpack.c.b16 %v1621, %v1620
    %v1656 = vpack.c.b16 %v1623, %v1622
    %v1657 = vpack.c.b16 %v1625, %v1624
    %v1658 = vpack.c.b16 %v1627, %v1626
    %v1659 = vpack.c.b16 %v1629, %v1628
    %v1660 = vpack.c.b16 %v1631, %v1630
    %v1661 = vpack.c.b16 %v1633, %v1632
    %v1662 = vpack.c.b16 %v1635, %v1634
    %v1663 = vpack.c.b16 %v1637, %v1636
    %v1664 = vpack.c.b16 %v1639, %v1638
    %v1665 = vpack.c.b16 %v1641, %v1640
    %1690 = vmatprep.subr.bf16.mxu0 0
    %1691 = vmatpush1.bf16.msra.mxu0 %v1649
    %1692 = vmatprep.subr.bf16.mxu0 0
    %1693 = vmatpush1.bf16.msra.mxu0 %v1648
    %1694 = vmatprep.subr.bf16.mxu0 0
    %1695 = vmatpush1.bf16.msra.mxu0 %v1647
    %1696 = vmatprep.subr.bf16.mxu0 0
    %1697 = vmatpush1.bf16.msra.mxu0 %v1646
    %1698 = vmatprep.subr.bf16.mxu0 0
    %1699 = vmatpush1.bf16.msra.mxu0 %v1645
    %1700 = vmatprep.subr.bf16.mxu0 0
    %1701 = vmatpush1.bf16.msra.mxu0 %v1644
    %1702 = vmatprep.subr.bf16.mxu0 0
    %1703 = vmatpush1.bf16.msra.mxu0 %v1643
    %1704 = vmatprep.subr.bf16.mxu0 0
    %1705 = vmatpush1.bf16.msra.mxu0 %v1642
    %1706 = vmatprep.subr.bf16.mxu0 0
    %1707 = vmatpush2.bf16.msra.mxu0 %v1657
    %1708 = vmatprep.subr.bf16.mxu0 0
    %1709 = vmatpush2.bf16.msra.mxu0 %v1656
    %1710 = vmatprep.subr.bf16.mxu0 0
    %1711 = vmatpush2.bf16.msra.mxu0 %v1655
    %1712 = vmatprep.subr.bf16.mxu0 0
    %1713 = vmatpush2.bf16.msra.mxu0 %v1654
    %1714 = vmatprep.subr.bf16.mxu0 0
    %1715 = vmatpush2.bf16.msra.mxu0 %v1653
    %1716 = vmatprep.subr.bf16.mxu0 0
    %1717 = vmatpush2.bf16.msra.mxu0 %v1652
    %1718 = vmatprep.subr.bf16.mxu0 0
    %1719 = vmatpush2.bf16.msra.mxu0 %v1651
    %1720 = vmatprep.subr.bf16.mxu0 0
    %1721 = vmatpush2.bf16.msra.mxu0 %v1650
    %1722 = vmatprep.mubr.bf16.mxu0 %v1489
    %1723 = vmatmul.mubr.bf16.gmra.mxu0 %v1488
    %v1724 = vpop.f32.mrf.mxu0
    %v1725 = vadd.f32 %v1544, %v1724
    %v1726 = vpop.f32.mrf.mxu0
    %v1727 = vpop.f32.mrf.mxu0
    %v1728 = vpop.f32.mrf.mxu0
    %1729 = vdwg.mxu0
    %1730 = vmatprep.subr.bf16.mxu0 0
    %1731 = vmatpush1.bf16.msra.mxu0 %v1665
    %1732 = vmatprep.subr.bf16.mxu0 0
    %1733 = vmatpush1.bf16.msra.mxu0 %v1664
    %1734 = vmatprep.subr.bf16.mxu0 0
    %1735 = vmatpush1.bf16.msra.mxu0 %v1663
    %1736 = vmatprep.subr.bf16.mxu0 0
    %1737 = vmatpush1.bf16.msra.mxu0 %v1662
    %1738 = vmatprep.subr.bf16.mxu0 0
    %1739 = vmatpush1.bf16.msra.mxu0 %v1661
    %1740 = vmatprep.subr.bf16.mxu0 0
    %1741 = vmatpush1.bf16.msra.mxu0 %v1660
    %1742 = vmatprep.subr.bf16.mxu0 0
    %1743 = vmatpush1.bf16.msra.mxu0 %v1659
    %1744 = vmatprep.subr.bf16.mxu0 0
    %1745 = vmatpush1.bf16.msra.mxu0 %v1658
    %1746 = vmatprep.subr.bf16.mxu0 0
    %1747 = vmatpush2.bf16.msra.mxu0 0
    %1748 = vmatprep.subr.bf16.mxu0 0
    %1749 = vmatpush2.bf16.msra.mxu0 0
    %1750 = vmatprep.subr.bf16.mxu0 0
    %1751 = vmatpush2.bf16.msra.mxu0 0
    %1752 = vmatprep.subr.bf16.mxu0 0
    %1753 = vmatpush2.bf16.msra.mxu0 0
    %1754 = vmatprep.subr.bf16.mxu0 0
    %1755 = vmatpush2.bf16.msra.mxu0 0
    %1756 = vmatprep.subr.bf16.mxu0 0
    %1757 = vmatpush2.bf16.msra.mxu0 0
    %1758 = vmatprep.subr.bf16.mxu0 0
    %1759 = vmatpush2.bf16.msra.mxu0 0
    %1760 = vmatprep.subr.bf16.mxu0 0
    %1761 = vmatpush2.bf16.msra.mxu0 0
    %1762 = vmatprep.mubr.bf16.mxu0 0
    %1763 = vmatmul.mubr.bf16.gmra.mxu0 %v1490
    %v1764 = vpop.f32.mrf.mxu0
    %v1765 = vadd.f32 %v1725, %v1764
    %v1766 = vpop.f32.mrf.mxu0
    %v1767 = vpop.f32.mrf.mxu0
    %v1768 = vpop.f32.mrf.mxu0
    %1769 = vdwg.mxu0
    %1770 = vmax.xlane.f32.xlu0 %v1765
    %v1771 = vpop.xlane.xlu0 %1770
    %v1772 = vsub.f32 %v1765, %v1771
    %v1773 = vmul.f32 %v1772, 1.442695
    %v1774 = vpow.pop %v1773
    %1775 = vadd.xlane.f32.xlu0 %v1774
    %v1776 = vpop.xlane.xlu0 %1775
    %v1777 = vrcp.pop %v1776
    %v1778 = vmul.f32 %v1776, %v1777
    %v1779 = vsub.f32 2.0, %v1778
    %v1780 = vmul.f32 %v1777, %v1779
    %v1781 = vmul.f32 %v1774, %v1780
    %1782 = vst [vmem:[#allocation22] sm:$0xff] %v1781
    // Predicated region
    $region110: #{critic_forward.1} parent=1 // pred_check
      _
    $region111: #{critic_forward.1} parent=1 // pred_check_branch
      %1784 = sbr.rel (0) target = $region113
    $region112: #{critic_forward.1} parent=1 // pred_region
      %s1786 = ssub.s32 128, 128
      %1787 = vsyncadd [#allocation4], %s1786
      %s1789 = sshll.u32 [#allocation22], 4
      %s1790 = int_to_ptr.vmem [resolvable:$true] %s1789
      %1792 = dma.vmem_to_hbm [thread:$0]  %s1790, 128, %s15, [#allocation4]
    $region113: #{critic_forward.1} parent=1 // pred_fallthru
      _
    // Predicated region
    $region114: #{critic_forward.1} parent=1 // pred_check
      _
    $region115: #{critic_forward.1} parent=1 // pred_check_branch
      %1794 = sbr.rel (0) target = $region117
    $region116: #{critic_forward.1} parent=1 // pred_region
      %1795 = dma.done [#allocation4], 128
    $region117: #{critic_forward.1} parent=1 // pred_fallthru
      _
    %1796 = vsyncpa [#allocation3], 1
    %1797 = vsyncpa [#allocation6], 1
    %1798 = vsyncpa [#allocation9], 1
    %1799 = vsyncpa [#allocation12], 1
    %1800 = vsyncpa [#allocation15], 1
    %1801 = vsyncpa [#allocation18], 1
    %1802 = vsyncpa [#allocation21], 1
    %1803 = vsyncpa [#allocation4], 1

</llo_original>
